<compile_context>
chip_gen: v7x
topology: tpu7x:2x2x1
jax: 0.10.0
libtpu: 0.0.40
codegen_flags: <defaults>
</compile_context>

<pallas_src>
import functools

import jax
import jax.numpy as jnp
from jax import lax
from jax.experimental import pallas as pl
from jax.experimental.pallas import tpu as pltpu

EPS = 1e-5  # GlobalLayerNorm eps


def tcn_block_kernel(x_ref, aux_ref, w1_ref, b1_ref, a1_ref, g1_ref, be1_ref,
                     wd_ref, bd_ref, a2_ref, wsg_ref, wsg2_ref, bias_ref,
                     o_ref, *, kernel_size, dilation, pad, t_true):
    Tp = x_ref.shape[2]                       # lane-padded time length
    Cc = w1_ref.shape[0]
    inv_ct = 1.0 / float(Cc * t_true)         # gLN divides by the TRUE C*T
    pad_cols = float(Tp - t_true)

    # PReLU slopes (scalars from SMEM)
    a1 = a1_ref[0]
    a2 = a2_ref[0]

    # Weights / per-channel params (grid-invariant, stay resident in VMEM).
    w1 = w1_ref[...]                          # [Cc, Cin]   (bf16 by default)
    b1 = b1_ref[...]                          # [Cc, 1]
    g1 = g1_ref[...]                          # [Cc, 1]
    be1 = be1_ref[...]                        # [Cc, 1]
    wd = wd_ref[...]                          # [Cc, K]
    bd = bd_ref[...]                          # [Cc, 1]
    wsg = wsg_ref[...]                        # [Cin, Cc]   (= ws * g2, bf16)
    wsg2 = wsg2_ref[...]                      # [Cin, 1]    (= ws @ g2)
    bias_c = bias_ref[...]                    # [Cin, 1]    (= ws @ be2 + bs)

    # Validity mask for the padded time columns.
    mask = (lax.broadcasted_iota(jnp.int32, (1, Tp), 1) < t_true
            ).astype(jnp.float32)

    xb = x_ref[0]                             # [Cin, Tp]
    auxb = aux_ref[0]                         # [Cin, 1]

    # speaker gating: y = x * relu(aux)
    y0 = xb * jnp.maximum(auxb, 0.0)

    # conv1x1 (+bias) and PReLU1 (bf16 operands, f32 accumulation)
    y1 = jnp.dot(w1, y0.astype(w1.dtype),
                 preferred_element_type=jnp.float32) + b1
    y2 = jnp.where(y1 > 0, y1, a1 * y1)

    # GlobalLayerNorm 1 statistics.  Padded columns of y2 equal prelu(b1)
    # exactly (y0 is zero there), so correct unmasked full-tile sums instead
    # of spending a [Cc,Tp] mask multiply.  Lane-axis partial reduce first.
    c1 = jnp.where(b1 > 0, b1, a1 * b1)                        # [Cc, 1]
    row_s1 = jnp.sum(y2, axis=-1, keepdims=True)               # [Cc, 1]
    row_ss1 = jnp.sum(y2 * y2, axis=-1, keepdims=True)         # [Cc, 1]
    s1 = jnp.sum(row_s1) - pad_cols * jnp.sum(c1)
    ss1 = jnp.sum(row_ss1) - pad_cols * jnp.sum(c1 * c1)
    mean1 = s1 * inv_ct
    var1 = jnp.maximum(ss1 * inv_ct - mean1 * mean1, 0.0)
    inv1 = lax.rsqrt(var1 + EPS)
    scale1 = g1 * inv1                                         # [Cc, 1]
    shift1 = be1 - mean1 * scale1                              # [Cc, 1]
    # Normalized activation; padded columns forced to zero so the depthwise
    # taps see the same zero padding as the reference conv.
    yn = (scale1 * y2 + shift1) * mask

    # Depthwise conv: K taps via XLU roll.  Because Tp - T >= pad, any
    # circular wrap lands only in masked (>= T) columns.
    z = bd                                                     # dconv bias
    for k in range(kernel_size):
        off = k * dilation - pad
        tap = yn if off == 0 else pltpu.roll(yn, shift=(-off) % Tp, axis=1)
        z = z + wd[:, k:k + 1] * tap

    # PReLU2
    z2 = jnp.where(z > 0, z, a2 * z)

    # GlobalLayerNorm 2 statistics (applied through folded sconv weights).
    zm = z2 * mask
    row_s2 = jnp.sum(zm, axis=-1, keepdims=True)
    row_ss2 = jnp.sum(zm * zm, axis=-1, keepdims=True)
    s2 = jnp.sum(row_s2)
    ss2 = jnp.sum(row_ss2)
    mean2 = s2 * inv_ct
    var2 = jnp.maximum(ss2 * inv_ct - mean2 * mean2, 0.0)
    inv2 = lax.rsqrt(var2 + EPS)

    # sconv with gLN2 folded in:
    #   ws @ (g2*(z2-mean2)*inv2 + be2) + bs + x
    # = inv2*(ws*g2) @ z2 + (ws@be2 + bs - inv2*mean2*(ws@g2)) + x
    out = jnp.dot(wsg, z2.astype(wsg.dtype),
                  preferred_element_type=jnp.float32) * inv2
    out = out + (bias_c - (inv2 * mean2) * wsg2) + xb
    o_ref[0] = out.astype(o_ref.dtype)


def tcn_block_spk1(x, aux, p, *, kernel_size=3, dilation=1,
                   mxu_dtype=jnp.bfloat16):
    N, Cin, T = x.shape
    Cc = p["w1"].shape[0]
    pad = dilation * (kernel_size - 1) // 2       # causal=False padding

    # Lane-dense time axis with at least `pad` slack columns so pltpu.roll's
    # circular wrap stays inside masked columns.
    Tp = pl.cdiv(T + pad, 128) * 128

    f32 = jnp.float32
    xp = jnp.pad(x, ((0, 0), (0, 0), (0, Tp - T)))
    auxp = aux[:, :, None].astype(f32)                          # [N, Cin, 1]

    # Parameter-only reshapes / folding (trace-time, parameters only).
    w1 = p["w1"]
    wsg = p["ws"] * p["g2"][None, :]                            # [Cin, Cc]
    if mxu_dtype is not None:                                   # bf16 MXU path
        w1 = w1.astype(mxu_dtype)
        wsg = wsg.astype(mxu_dtype)
    b1c = p["b1"].reshape(Cc, 1).astype(f32)
    g1c = p["g1"].reshape(Cc, 1).astype(f32)
    be1c = p["be1"].reshape(Cc, 1).astype(f32)
    bdc = p["bd"].reshape(Cc, 1).astype(f32)
    wsg2c = (p["ws"] @ p["g2"]).reshape(Cin, 1).astype(f32)     # ws @ g2
    biasc = (p["ws"] @ p["be2"] + p["bs"]).reshape(Cin, 1).astype(f32)

    kern = functools.partial(tcn_block_kernel, kernel_size=kernel_size,
                             dilation=dilation, pad=pad, t_true=T)

    def invariant(shape):                      # grid-invariant whole-array block
        r = len(shape)
        return pl.BlockSpec(shape, lambda n: (0,) * r)

    smem = pl.BlockSpec(memory_space=pltpu.MemorySpace.SMEM)

    in_specs = [
        pl.BlockSpec((1, Cin, Tp), lambda n: (n, 0, 0)),         # x
        pl.BlockSpec((1, Cin, 1), lambda n: (n, 0, 0)),          # aux
        invariant((Cc, Cin)),                                    # w1
        invariant((Cc, 1)),                                      # b1
        smem,                                                    # prelu1 slope
        invariant((Cc, 1)), invariant((Cc, 1)),                  # g1, be1
        invariant((Cc, kernel_size)),                            # dconv weight
        invariant((Cc, 1)),                                      # dconv bias
        smem,                                                    # prelu2 slope
        invariant((Cin, Cc)),                                    # ws * g2
        invariant((Cin, 1)),                                     # ws @ g2
        invariant((Cin, 1)),                                     # ws@be2 + bs
    ]

    # Rough VMEM working set (per grid step): double-buffered x/out blocks +
    # ~6 live [Cc,Tp] f32 temps + resident weights.  Cap at 64 MiB for v7x.
    io_bytes = 4 * (Cin * Tp * 4)
    temp_bytes = 6 * Cc * Tp * 4
    wgt_bytes = 2 * Cc * Cin * 4 + Cc * (kernel_size + 8) * 4
    vmem_limit = int(min(64 * 1024 * 1024,
                         max(32 * 1024 * 1024,
                             2 * (io_bytes + temp_bytes + wgt_bytes))))

    cost = pl.CostEstimate(
        flops=int(N * (4 * Cc * Cin * Tp + (2 * kernel_size + 12) * Cc * Tp)),
        transcendentals=int(2 * N),
        bytes_accessed=int(2 * N * Cin * Tp * 4 + N * Cin * 4
                           + (2 * Cc * Cin + Cc * (kernel_size + 4)
                              + 3 * Cin) * 4),
    )

    out = pl.pallas_call(
        kern,
        out_shape=jax.ShapeDtypeStruct((N, Cin, Tp), x.dtype),
        grid=(N,),
        in_specs=in_specs,
        out_specs=pl.BlockSpec((1, Cin, Tp), lambda n: (n, 0, 0)),
        input_output_aliases={0: 0},          # reuse xp's HBM for the output
        cost_estimate=cost,
        compiler_params=pltpu.CompilerParams(
            dimension_semantics=("parallel",),
            vmem_limit_bytes=vmem_limit),
    )(xp, auxp, w1, b1c, p["a1"], g1c, be1c, p["wd"], bdc, p["a2"],
      wsg, wsg2c, biasc)

    return out[:, :, :T]


def tcn_block_ref(x, aux, p, *, kernel_size=3, dilation=1):
    """Pure-JAX reference matching the PyTorch forward semantics."""
    pad = dilation * (kernel_size - 1) // 2
    T = x.shape[-1]
    y = x * jnp.maximum(aux, 0.0)[:, :, None]
    y = jnp.einsum("oi,nit->not", p["w1"], y) + p["b1"][None, :, None]
    y = jnp.where(y > 0, y, p["a1"][0] * y)
    m = jnp.mean(y, axis=(1, 2), keepdims=True)
    v = jnp.mean((y - m) ** 2, axis=(1, 2), keepdims=True)
    y = p["g1"][None, :, None] * (y - m) / jnp.sqrt(v + EPS) + p["be1"][None, :, None]
    ypad = jnp.pad(y, ((0, 0), (0, 0), (pad, pad)))
    z = sum(p["wd"][None, :, k, None] * ypad[:, :, k * dilation:k * dilation + T]
            for k in range(kernel_size)) + p["bd"][None, :, None]
    z = jnp.where(z > 0, z, p["a2"][0] * z)
    m2 = jnp.mean(z, axis=(1, 2), keepdims=True)
    v2 = jnp.mean((z - m2) ** 2, axis=(1, 2), keepdims=True)
    z = p["g2"][None, :, None] * (z - m2) / jnp.sqrt(v2 + EPS) + p["be2"][None, :, None]
    return jnp.einsum("oi,nit->not", p["ws"], z) + p["bs"][None, :, None] + x


if __name__ == "__main__":
    # Small shapes consistent with the forward (aux dim D must equal in_channels
    # for the x * relu(aux) gating to broadcast, as in the PyTorch forward).
    N, Cin, Cc, T, K = 4, 16, 32, 100, 3

    key = jax.random.PRNGKey(0)
    ks = jax.random.split(key, 12)
    f32 = jnp.float32

    params = {
        "w1":  0.1 * jax.random.normal(ks[0], (Cc, Cin), f32),   # conv1x1 weight
        "b1":  0.1 * jax.random.normal(ks[1], (Cc,), f32),
        "a1":  jnp.full((1,), 0.25, f32),                        # PReLU1 slope
        "g1":  1.0 + 0.1 * jax.random.normal(ks[2], (Cc,), f32), # gLN1 gamma
        "be1": 0.1 * jax.random.normal(ks[3], (Cc,), f32),       # gLN1 beta
        "wd":  0.1 * jax.random.normal(ks[4], (Cc, K), f32),     # depthwise weight
        "bd":  0.1 * jax.random.normal(ks[5], (Cc,), f32),
        "a2":  jnp.full((1,), 0.25, f32),                        # PReLU2 slope
        "g2":  1.0 + 0.1 * jax.random.normal(ks[6], (Cc,), f32),
        "be2": 0.1 * jax.random.normal(ks[7], (Cc,), f32),
        "ws":  0.1 * jax.random.normal(ks[8], (Cin, Cc), f32),   # sconv weight
        "bs":  0.1 * jax.random.normal(ks[9], (Cin,), f32),
    }

    x = jax.random.normal(ks[10], (N, Cin, T), f32)
    aux = jax.random.normal(ks[11], (N, Cin), f32)   # speaker embedding (D == Cin)

    for dil in (1, 2):
        ref = tcn_block_ref(x, aux, params, kernel_size=K, dilation=dil)

        # f32 MXU path: tight structural/semantic check.
        out32 = jax.block_until_ready(
            tcn_block_spk1(x, aux, params, kernel_size=K, dilation=dil,
                           mxu_dtype=None))
        assert out32.shape == (N, Cin, T)
        assert jnp.allclose(out32, ref, atol=2e-3, rtol=2e-3), \
            f"f32 path mismatch vs reference (dilation={dil})"

        # Default bf16 MXU path: looser tolerance (weights/activation operands
        # of the two matmuls are bf16, accumulation stays f32).
        outbf = jax.block_until_ready(
            tcn_block_spk1(x, aux, params, kernel_size=K, dilation=dil))
        assert outbf.shape == (N, Cin, T)
        assert jnp.allclose(outbf, ref, atol=5e-2, rtol=5e-2), \
            f"bf16 path mismatch vs reference (dilation={dil})"

    print("KERNEL_OK")
</pallas_src>

<mosaic_0001>
module attributes {stable_mosaic.version = 11 : i64} {
  func.func @tcn_block_kernel(%arg0: i32, %arg1: memref<1x16x128xf32, #tpu.memory_space<vmem>>, %arg2: memref<1x16x1xf32, #tpu.memory_space<vmem>>, %arg3: memref<32x16xf32, #tpu.memory_space<vmem>>, %arg4: memref<32x1xf32, #tpu.memory_space<vmem>>, %arg5: memref<1xf32, #tpu.memory_space<smem>>, %arg6: memref<32x1xf32, #tpu.memory_space<vmem>>, %arg7: memref<32x1xf32, #tpu.memory_space<vmem>>, %arg8: memref<32x3xf32, #tpu.memory_space<vmem>>, %arg9: memref<32x1xf32, #tpu.memory_space<vmem>>, %arg10: memref<1xf32, #tpu.memory_space<smem>>, %arg11: memref<16x32xf32, #tpu.memory_space<vmem>>, %arg12: memref<16x1xf32, #tpu.memory_space<vmem>>, %arg13: memref<16x1xf32, #tpu.memory_space<vmem>>, %arg14: memref<1x16x128xf32, #tpu.memory_space<vmem>>) attributes {dimension_semantics = [#tpu.dimension_semantics<parallel>], iteration_bounds = array<i64: 4>, scalar_prefetch = 0 : i64, scratch_operands = 0 : i64, tpu.core_type = #tpu.core_type<tc>, window_params = [{transform_indices = @transform_0, window_bounds = array<i64: 1, 16, 128>}, {transform_indices = @transform_1, window_bounds = array<i64: 1, 16, 1>}, {pipeline_mode = #tpu.pipeline_mode<synchronous>, transform_indices = @transform_2, window_bounds = array<i64: 32, 16>}, {pipeline_mode = #tpu.pipeline_mode<synchronous>, transform_indices = @transform_3, window_bounds = array<i64: 32, 1>}, {transform_indices = @transform_4, window_bounds = array<i64: 1>}, {pipeline_mode = #tpu.pipeline_mode<synchronous>, transform_indices = @transform_5, window_bounds = array<i64: 32, 1>}, {pipeline_mode = #tpu.pipeline_mode<synchronous>, transform_indices = @transform_6, window_bounds = array<i64: 32, 1>}, {pipeline_mode = #tpu.pipeline_mode<synchronous>, transform_indices = @transform_7, window_bounds = array<i64: 32, 3>}, {pipeline_mode = #tpu.pipeline_mode<synchronous>, transform_indices = @transform_8, window_bounds = array<i64: 32, 1>}, {transform_indices = @transform_9, window_bounds = array<i64: 1>}, {pipeline_mode = #tpu.pipeline_mode<synchronous>, transform_indices = @transform_10, window_bounds = array<i64: 16, 32>}, {pipeline_mode = #tpu.pipeline_mode<synchronous>, transform_indices = @transform_11, window_bounds = array<i64: 16, 1>}, {pipeline_mode = #tpu.pipeline_mode<synchronous>, transform_indices = @transform_12, window_bounds = array<i64: 16, 1>}, {transform_indices = @transform_13, window_bounds = array<i64: 1, 16, 128>}]} {
    %c0 = arith.constant 0 : index
    %0 = memref.load %arg5[%c0] : memref<1xf32, #tpu.memory_space<smem>>
    %c0_0 = arith.constant 0 : index
    %1 = memref.load %arg10[%c0_0] : memref<1xf32, #tpu.memory_space<smem>>
    %c0_1 = arith.constant 0 : index
    %c0_2 = arith.constant 0 : index
    %2 = vector.load %arg3[%c0_1, %c0_2] : memref<32x16xf32, #tpu.memory_space<vmem>>, vector<32x16xf32>
    %c0_3 = arith.constant 0 : index
    %c0_4 = arith.constant 0 : index
    %3 = vector.load %arg4[%c0_3, %c0_4] : memref<32x1xf32, #tpu.memory_space<vmem>>, vector<32x1xf32>
    %c0_5 = arith.constant 0 : index
    %c0_6 = arith.constant 0 : index
    %4 = vector.load %arg6[%c0_5, %c0_6] : memref<32x1xf32, #tpu.memory_space<vmem>>, vector<32x1xf32>
    %c0_7 = arith.constant 0 : index
    %c0_8 = arith.constant 0 : index
    %5 = vector.load %arg7[%c0_7, %c0_8] : memref<32x1xf32, #tpu.memory_space<vmem>>, vector<32x1xf32>
    %c0_9 = arith.constant 0 : index
    %c0_10 = arith.constant 0 : index
    %6 = vector.load %arg8[%c0_9, %c0_10] : memref<32x3xf32, #tpu.memory_space<vmem>>, vector<32x3xf32>
    %c0_11 = arith.constant 0 : index
    %c0_12 = arith.constant 0 : index
    %7 = vector.load %arg9[%c0_11, %c0_12] : memref<32x1xf32, #tpu.memory_space<vmem>>, vector<32x1xf32>
    %c0_13 = arith.constant 0 : index
    %c0_14 = arith.constant 0 : index
    %8 = vector.load %arg11[%c0_13, %c0_14] : memref<16x32xf32, #tpu.memory_space<vmem>>, vector<16x32xf32>
    %c0_15 = arith.constant 0 : index
    %c0_16 = arith.constant 0 : index
    %9 = vector.load %arg12[%c0_15, %c0_16] : memref<16x1xf32, #tpu.memory_space<vmem>>, vector<16x1xf32>
    %c0_17 = arith.constant 0 : index
    %c0_18 = arith.constant 0 : index
    %10 = vector.load %arg13[%c0_17, %c0_18] : memref<16x1xf32, #tpu.memory_space<vmem>>, vector<16x1xf32>
    %11 = tpu.iota {dimensions = array<i32: 1>} : vector<1x128xi32>
    %c100_i32 = arith.constant 100 : i32
    %12 = vector.broadcast %c100_i32 : i32 to vector<1x128xi32>
    %13 = arith.cmpi slt, %11, %12 : vector<1x128xi32>
    %14 = arith.extui %13 : vector<1x128xi1> to vector<1x128xi32>
    %15 = arith.sitofp %14 : vector<1x128xi32> to vector<1x128xf32>
    %c0_19 = arith.constant 0 : index
    %c0_20 = arith.constant 0 : index
    %c0_21 = arith.constant 0 : index
    %16 = vector.load %arg1[%c0_19, %c0_20, %c0_21] : memref<1x16x128xf32, #tpu.memory_space<vmem>>, vector<1x16x128xf32>
    %17 = vector.shape_cast %16 : vector<1x16x128xf32> to vector<16x128xf32>
    %c0_22 = arith.constant 0 : index
    %c0_23 = arith.constant 0 : index
    %c0_24 = arith.constant 0 : index
    %18 = vector.load %arg2[%c0_22, %c0_23, %c0_24] : memref<1x16x1xf32, #tpu.memory_space<vmem>>, vector<1x16x1xf32>
    %19 = vector.shape_cast %18 : vector<1x16x1xf32> to vector<16x1xf32>
    %cst = arith.constant 0.000000e+00 : f32
    %20 = vector.broadcast %cst : f32 to vector<16x1xf32>
    %21 = arith.maximumf %19, %20 : vector<16x1xf32>
    %22 = vector.broadcast %21 : vector<16x1xf32> to vector<16x128xf32>
    %23 = arith.mulf %17, %22 : vector<16x128xf32>
    %cst_25 = arith.constant dense<0.000000e+00> : vector<32x128xf32>
    %24 = tpu.matmul %2, %23, %cst_25 {dimension_numbers = #tpu.dot_dimension_numbers<[1], [0], [0], [1], [0, 0, 1, 1], [], []>} : vector<32x16xf32>, vector<16x128xf32>, vector<32x128xf32> -> vector<32x128xf32>
    %25 = vector.broadcast %3 : vector<32x1xf32> to vector<32x128xf32>
    %26 = arith.addf %24, %25 : vector<32x128xf32>
    %cst_26 = arith.constant 0.000000e+00 : f32
    %27 = vector.broadcast %cst_26 : f32 to vector<32x128xf32>
    %28 = arith.cmpf ogt, %26, %27 : vector<32x128xf32>
    %29 = vector.broadcast %0 : f32 to vector<32x128xf32>
    %30 = arith.mulf %29, %26 : vector<32x128xf32>
    %31 = arith.select %28, %26, %30 : vector<32x128xi1>, vector<32x128xf32>
    %cst_27 = arith.constant 0.000000e+00 : f32
    %32 = vector.broadcast %cst_27 : f32 to vector<32x1xf32>
    %33 = arith.cmpf ogt, %3, %32 : vector<32x1xf32>
    %34 = vector.broadcast %0 : f32 to vector<32x1xf32>
    %35 = arith.mulf %34, %3 : vector<32x1xf32>
    %36 = arith.select %33, %3, %35 : vector<32x1xi1>, vector<32x1xf32>
    %cst_28 = arith.constant dense<0.000000e+00> : vector<32xf32>
    %37 = vector.multi_reduction <add>, %31, %cst_28 [1] : vector<32x128xf32> to vector<32xf32>
    %38 = vector.shape_cast %37 : vector<32xf32> to vector<32x1xf32>
    %39 = arith.mulf %31, %31 : vector<32x128xf32>
    %cst_29 = arith.constant dense<0.000000e+00> : vector<32xf32>
    %40 = vector.multi_reduction <add>, %39, %cst_29 [1] : vector<32x128xf32> to vector<32xf32>
    %41 = vector.shape_cast %40 : vector<32xf32> to vector<32x1xf32>
    %42 = vector.shape_cast %38 : vector<32x1xf32> to vector<1x32x1xf32>
    %cst_30 = arith.constant dense<0.000000e+00> : vector<1xf32>
    %43 = vector.multi_reduction <add>, %42, %cst_30 [1, 2] : vector<1x32x1xf32> to vector<1xf32>
    %44 = vector.shape_cast %43 : vector<1xf32> to vector<1x1x1xf32>
    %45 = vector.extract %44[0, 0, 0] : f32 from vector<1x1x1xf32>
    %46 = vector.shape_cast %36 : vector<32x1xf32> to vector<1x32x1xf32>
    %cst_31 = arith.constant dense<0.000000e+00> : vector<1xf32>
    %47 = vector.multi_reduction <add>, %46, %cst_31 [1, 2] : vector<1x32x1xf32> to vector<1xf32>
    %48 = vector.shape_cast %47 : vector<1xf32> to vector<1x1x1xf32>
    %49 = vector.extract %48[0, 0, 0] : f32 from vector<1x1x1xf32>
    %cst_32 = arith.constant 2.800000e+01 : f32
    %50 = arith.mulf %cst_32, %49 : f32
    %51 = arith.subf %45, %50 : f32
    %52 = vector.shape_cast %41 : vector<32x1xf32> to vector<1x32x1xf32>
    %cst_33 = arith.constant dense<0.000000e+00> : vector<1xf32>
    %53 = vector.multi_reduction <add>, %52, %cst_33 [1, 2] : vector<1x32x1xf32> to vector<1xf32>
    %54 = vector.shape_cast %53 : vector<1xf32> to vector<1x1x1xf32>
    %55 = vector.extract %54[0, 0, 0] : f32 from vector<1x1x1xf32>
    %56 = arith.mulf %36, %36 : vector<32x1xf32>
    %57 = vector.shape_cast %56 : vector<32x1xf32> to vector<1x32x1xf32>
    %cst_34 = arith.constant dense<0.000000e+00> : vector<1xf32>
    %58 = vector.multi_reduction <add>, %57, %cst_34 [1, 2] : vector<1x32x1xf32> to vector<1xf32>
    %59 = vector.shape_cast %58 : vector<1xf32> to vector<1x1x1xf32>
    %60 = vector.extract %59[0, 0, 0] : f32 from vector<1x1x1xf32>
    %cst_35 = arith.constant 2.800000e+01 : f32
    %61 = arith.mulf %cst_35, %60 : f32
    %62 = arith.subf %55, %61 : f32
    %cst_36 = arith.constant 3.125000e-04 : f32
    %63 = arith.mulf %51, %cst_36 : f32
    %cst_37 = arith.constant 3.125000e-04 : f32
    %64 = arith.mulf %62, %cst_37 : f32
    %65 = arith.mulf %63, %63 : f32
    %66 = arith.subf %64, %65 : f32
    %cst_38 = arith.constant 0.000000e+00 : f32
    %67 = arith.maximumf %66, %cst_38 : f32
    %cst_39 = arith.constant 9.99999974E-6 : f32
    %68 = arith.addf %67, %cst_39 : f32
    %69 = math.rsqrt %68 : f32
    %70 = vector.broadcast %69 : f32 to vector<32x1xf32>
    %71 = arith.mulf %4, %70 : vector<32x1xf32>
    %72 = vector.broadcast %63 : f32 to vector<32x1xf32>
    %73 = arith.mulf %72, %71 : vector<32x1xf32>
    %74 = arith.subf %5, %73 : vector<32x1xf32>
    %75 = vector.broadcast %71 : vector<32x1xf32> to vector<32x128xf32>
    %76 = arith.mulf %75, %31 : vector<32x128xf32>
    %77 = vector.broadcast %74 : vector<32x1xf32> to vector<32x128xf32>
    %78 = arith.addf %76, %77 : vector<32x128xf32>
    %79 = vector.broadcast %15 : vector<1x128xf32> to vector<32x128xf32>
    %80 = arith.mulf %78, %79 : vector<32x128xf32>
    %c1_i32 = arith.constant 1 : i32
    %81 = tpu.dynamic_rotate %80 by %c1_i32 dim 1 : vector<32x128xf32>, i32 -> vector<32x128xf32>
    %82 = vector.extract_strided_slice %6 {offsets = [0, 0], sizes = [32, 1], strides = [1, 1]} : vector<32x3xf32> to vector<32x1xf32>
    %83 = vector.broadcast %82 : vector<32x1xf32> to vector<32x128xf32>
    %84 = arith.mulf %83, %81 : vector<32x128xf32>
    %85 = vector.broadcast %7 : vector<32x1xf32> to vector<32x128xf32>
    %86 = arith.addf %85, %84 : vector<32x128xf32>
    %87 = vector.extract_strided_slice %6 {offsets = [0, 1], sizes = [32, 1], strides = [1, 1]} : vector<32x3xf32> to vector<32x1xf32>
    %88 = vector.broadcast %87 : vector<32x1xf32> to vector<32x128xf32>
    %89 = arith.mulf %88, %80 : vector<32x128xf32>
    %90 = arith.addf %86, %89 : vector<32x128xf32>
    %c127_i32 = arith.constant 127 : i32
    %91 = tpu.dynamic_rotate %80 by %c127_i32 dim 1 : vector<32x128xf32>, i32 -> vector<32x128xf32>
    %92 = vector.extract_strided_slice %6 {offsets = [0, 2], sizes = [32, 1], strides = [1, 1]} : vector<32x3xf32> to vector<32x1xf32>
    %93 = vector.broadcast %92 : vector<32x1xf32> to vector<32x128xf32>
    %94 = arith.mulf %93, %91 : vector<32x128xf32>
    %95 = arith.addf %90, %94 : vector<32x128xf32>
    %cst_40 = arith.constant 0.000000e+00 : f32
    %96 = vector.broadcast %cst_40 : f32 to vector<32x128xf32>
    %97 = arith.cmpf ogt, %95, %96 : vector<32x128xf32>
    %98 = vector.broadcast %1 : f32 to vector<32x128xf32>
    %99 = arith.mulf %98, %95 : vector<32x128xf32>
    %100 = arith.select %97, %95, %99 : vector<32x128xi1>, vector<32x128xf32>
    %101 = vector.broadcast %15 : vector<1x128xf32> to vector<32x128xf32>
    %102 = arith.mulf %100, %101 : vector<32x128xf32>
    %cst_41 = arith.constant dense<0.000000e+00> : vector<32xf32>
    %103 = vector.multi_reduction <add>, %102, %cst_41 [1] : vector<32x128xf32> to vector<32xf32>
    %104 = vector.shape_cast %103 : vector<32xf32> to vector<32x1xf32>
    %105 = arith.mulf %102, %102 : vector<32x128xf32>
    %cst_42 = arith.constant dense<0.000000e+00> : vector<32xf32>
    %106 = vector.multi_reduction <add>, %105, %cst_42 [1] : vector<32x128xf32> to vector<32xf32>
    %107 = vector.shape_cast %106 : vector<32xf32> to vector<32x1xf32>
    %108 = vector.shape_cast %104 : vector<32x1xf32> to vector<1x32x1xf32>
    %cst_43 = arith.constant dense<0.000000e+00> : vector<1xf32>
    %109 = vector.multi_reduction <add>, %108, %cst_43 [1, 2] : vector<1x32x1xf32> to vector<1xf32>
    %110 = vector.shape_cast %109 : vector<1xf32> to vector<1x1x1xf32>
    %111 = vector.extract %110[0, 0, 0] : f32 from vector<1x1x1xf32>
    %112 = vector.shape_cast %107 : vector<32x1xf32> to vector<1x32x1xf32>
    %cst_44 = arith.constant dense<0.000000e+00> : vector<1xf32>
    %113 = vector.multi_reduction <add>, %112, %cst_44 [1, 2] : vector<1x32x1xf32> to vector<1xf32>
    %114 = vector.shape_cast %113 : vector<1xf32> to vector<1x1x1xf32>
    %115 = vector.extract %114[0, 0, 0] : f32 from vector<1x1x1xf32>
    %cst_45 = arith.constant 3.125000e-04 : f32
    %116 = arith.mulf %111, %cst_45 : f32
    %cst_46 = arith.constant 3.125000e-04 : f32
    %117 = arith.mulf %115, %cst_46 : f32
    %118 = arith.mulf %116, %116 : f32
    %119 = arith.subf %117, %118 : f32
    %cst_47 = arith.constant 0.000000e+00 : f32
    %120 = arith.maximumf %119, %cst_47 : f32
    %cst_48 = arith.constant 9.99999974E-6 : f32
    %121 = arith.addf %120, %cst_48 : f32
    %122 = math.rsqrt %121 : f32
    %cst_49 = arith.constant dense<0.000000e+00> : vector<16x128xf32>
    %123 = tpu.matmul %8, %100, %cst_49 {dimension_numbers = #tpu.dot_dimension_numbers<[1], [0], [0], [1], [0, 0, 1, 1], [], []>} : vector<16x32xf32>, vector<32x128xf32>, vector<16x128xf32> -> vector<16x128xf32>
    %124 = vector.broadcast %122 : f32 to vector<16x128xf32>
    %125 = arith.mulf %123, %124 : vector<16x128xf32>
    %126 = arith.mulf %122, %116 : f32
    %127 = vector.broadcast %126 : f32 to vector<16x1xf32>
    %128 = arith.mulf %127, %9 : vector<16x1xf32>
    %129 = arith.subf %10, %128 : vector<16x1xf32>
    %130 = vector.broadcast %129 : vector<16x1xf32> to vector<16x128xf32>
    %131 = arith.addf %125, %130 : vector<16x128xf32>
    %132 = arith.addf %131, %17 : vector<16x128xf32>
    %c0_50 = arith.constant 0 : index
    %c0_51 = arith.constant 0 : index
    %c0_52 = arith.constant 0 : index
    %133 = vector.load %arg14[%c0_50, %c0_51, %c0_52] : memref<1x16x128xf32, #tpu.memory_space<vmem>>, vector<1x16x128xf32>
    %134 = vector.shape_cast %133 : vector<1x16x128xf32> to vector<16x128xf32>
    %135 = vector.shape_cast %132 : vector<16x128xf32> to vector<1x16x128xf32>
    tpu.vector_store %arg14[%c0_50, %c0_51, %c0_52], %135 {strides = array<i32>} : memref<1x16x128xf32, #tpu.memory_space<vmem>>, vector<1x16x128xf32>,
    return
  }
  func.func @transform_0(%arg0: i32) -> (i32, i32, i32) {
    %c0_i32 = arith.constant 0 : i32
    %c0_i32_0 = arith.constant 0 : i32
    %c0_i32_1 = arith.constant 0 : i32
    return %arg0, %c0_i32, %c0_i32_0 : i32, i32, i32
  }
  func.func @transform_1(%arg0: i32) -> (i32, i32, i32) {
    %c0_i32 = arith.constant 0 : i32
    %c0_i32_0 = arith.constant 0 : i32
    %c0_i32_1 = arith.constant 0 : i32
    return %arg0, %c0_i32, %c0_i32_0 : i32, i32, i32
  }
  func.func @transform_2(%arg0: i32) -> (i32, i32) {
    %c0_i32 = arith.constant 0 : i32
    %c0_i32_0 = arith.constant 0 : i32
    %c0_i32_1 = arith.constant 0 : i32
    return %c0_i32, %c0_i32_0 : i32, i32
  }
  func.func @transform_3(%arg0: i32) -> (i32, i32) {
    %c0_i32 = arith.constant 0 : i32
    %c0_i32_0 = arith.constant 0 : i32
    %c0_i32_1 = arith.constant 0 : i32
    return %c0_i32, %c0_i32_0 : i32, i32
  }
  func.func @transform_4(%arg0: i32) -> i32 {
    %c0_i32 = arith.constant 0 : i32
    %c0_i32_0 = arith.constant 0 : i32
    return %c0_i32 : i32
  }
  func.func @transform_5(%arg0: i32) -> (i32, i32) {
    %c0_i32 = arith.constant 0 : i32
    %c0_i32_0 = arith.constant 0 : i32
    %c0_i32_1 = arith.constant 0 : i32
    return %c0_i32, %c0_i32_0 : i32, i32
  }
  func.func @transform_6(%arg0: i32) -> (i32, i32) {
    %c0_i32 = arith.constant 0 : i32
    %c0_i32_0 = arith.constant 0 : i32
    %c0_i32_1 = arith.constant 0 : i32
    return %c0_i32, %c0_i32_0 : i32, i32
  }
  func.func @transform_7(%arg0: i32) -> (i32, i32) {
    %c0_i32 = arith.constant 0 : i32
    %c0_i32_0 = arith.constant 0 : i32
    %c0_i32_1 = arith.constant 0 : i32
    return %c0_i32, %c0_i32_0 : i32, i32
  }
  func.func @transform_8(%arg0: i32) -> (i32, i32) {
    %c0_i32 = arith.constant 0 : i32
    %c0_i32_0 = arith.constant 0 : i32
    %c0_i32_1 = arith.constant 0 : i32
    return %c0_i32, %c0_i32_0 : i32, i32
  }
  func.func @transform_9(%arg0: i32) -> i32 {
    %c0_i32 = arith.constant 0 : i32
    %c0_i32_0 = arith.constant 0 : i32
    return %c0_i32 : i32
  }
  func.func @transform_10(%arg0: i32) -> (i32, i32) {
    %c0_i32 = arith.constant 0 : i32
    %c0_i32_0 = arith.constant 0 : i32
    %c0_i32_1 = arith.constant 0 : i32
    return %c0_i32, %c0_i32_0 : i32, i32
  }
  func.func @transform_11(%arg0: i32) -> (i32, i32) {
    %c0_i32 = arith.constant 0 : i32
    %c0_i32_0 = arith.constant 0 : i32
    %c0_i32_1 = arith.constant 0 : i32
    return %c0_i32, %c0_i32_0 : i32, i32
  }
  func.func @transform_12(%arg0: i32) -> (i32, i32) {
    %c0_i32 = arith.constant 0 : i32
    %c0_i32_0 = arith.constant 0 : i32
    %c0_i32_1 = arith.constant 0 : i32
    return %c0_i32, %c0_i32_0 : i32, i32
  }
  func.func @transform_13(%arg0: i32) -> (i32, i32, i32) {
    %c0_i32 = arith.constant 0 : i32
    %c0_i32_0 = arith.constant 0 : i32
    %c0_i32_1 = arith.constant 0 : i32
    return %arg0, %c0_i32, %c0_i32_0 : i32, i32, i32
  }
}

</mosaic_0001>

<llo_original>
// kernel: tpu_custom_call.1
$region0: #{tpu_custom_call.1}
  #allocation0 [shape = 'u32[]', space=smem, size = 0x4, offset = 0x4, fixed_abs, tag = 'smem constant byte address 0x4 - core index']
  #allocation1 [shape = 'u32[144,128]{1,0:T(1,128)}', space=vmem, size = 0x12000, scoped, tag = 'internal scratch']
  #allocation2 [shape = 'f32[1]{0:T(128)S(6)}', space=smem, size = 0x200, scoped, tag = 'scoped memory for tpu_custom_call.1']
  #allocation3 [shape = 'f32[1]{0:T(128)S(6)}', space=smem, size = 0x200, scoped, tag = 'scoped memory for tpu_custom_call.1']
  %s0 = inlined_call_operand.hbm [shape: f32[4,16,128], index: 0, kind: input, shape index: {}, may-alias: {0,13}]
  %s1 = inlined_call_operand.vmem [shape: f32[4,16,1], index: 1, kind: input, shape index: {}]
  %s2 = inlined_call_operand.vmem [shape: f32[32,16], index: 2, kind: input, shape index: {}]
  %s3 = inlined_call_operand.vmem [shape: f32[32,1], index: 3, kind: input, shape index: {}]
  %s4 = inlined_call_operand.<no memory space> [shape: f32[1], index: 4, kind: input, shape index: {}]
  %s5 = inlined_call_operand.vmem [shape: f32[32,1], index: 5, kind: input, shape index: {}]
  %s6 = inlined_call_operand.vmem [shape: f32[32,1], index: 6, kind: input, shape index: {}]
  %s7 = inlined_call_operand.vmem [shape: f32[32,3], index: 7, kind: input, shape index: {}]
  %s8 = inlined_call_operand.vmem [shape: f32[32,1], index: 8, kind: input, shape index: {}]
  %s9 = inlined_call_operand.<no memory space> [shape: f32[1], index: 9, kind: input, shape index: {}]
  %s10 = inlined_call_operand.vmem [shape: f32[16,32], index: 10, kind: input, shape index: {}]
  %s11 = inlined_call_operand.vmem [shape: f32[16,1], index: 11, kind: input, shape index: {}]
  %s12 = inlined_call_operand.vmem [shape: f32[16,1], index: 12, kind: input, shape index: {}]
  %s13 = inlined_call_operand.hbm [shape: f32[4,16,128], index: 13, kind: output, shape index: {}, may-alias: {0,13}]
  %s14 = sld [smem:[#allocation0]]
  $region89: #{tpu_custom_call.1} parent=0
    _
  %s16 = ssub.s32 1, %s14
  %s17 = scalar_select 0, %s16, %s14
  %18 = sst [smem:[#allocation2]] %s4
  %19 = sst [smem:[#allocation3]] %s9
  $region1: #{tpu_custom_call.1} parent=0
    #allocation4 [shape = 'u8[16384]{0}', space=vmem, size = 0x4000, scoped, tag = 'input window, operand 0']
    #allocation5 [shape = 's32[2]{0}', space=sflag, size = 0x8, scoped, tag = 'scoped memory for tpu_custom_call.1']
    #allocation6 [shape = 's32[2]{0}', space=sflag, size = 0x8, scoped, tag = 'scoped memory for tpu_custom_call.1']
    #allocation7 [shape = 'u8[16384]{0}', space=vmem, size = 0x4000, scoped, tag = 'output window, operand 0']
    %20 = vsyncpa [#allocation5], 0
    %s21 = scalar_lea.sflag [#allocation5], 1
    %22 = vsyncpa %s21, 0
    %23 = vsyncpa [#allocation6], 0
    %s24 = scalar_lea.sflag [#allocation6], 1
    %25 = vsyncpa %s24, 0
    loop: start=0, step=1, limit=6
    $region2: #{tpu_custom_call.1} parent=1 // loop_pre_header
      _
    $region3: #{tpu_custom_call.1} parent=1 // loop_header
      %s27 = sphi 0, %s31
      %p28 = scmp.ge.s32.totalorder %s27, 6
      %s37 = sphi 0, %s39
      %s40 = sphi 0, %s37
      %s41 = sphi 0, %s40
      %s57 = sphi 0, %s41
      %s63 = sphi 0, %s65
      %s66 = sphi 0, %s63
      %s67 = sphi 0, %s66
      %s83 = sphi 0, %s67
      %s87 = sphi 0, %s87
      %s89 = sphi 0, %s87
      %s90 = sphi 0, %s89
      %s104 = sphi 0, %s90
      %s108 = sphi 0, %s108
      %s110 = sphi 0, %s108
      %s111 = sphi 0, %s110
      %s125 = sphi 0, %s111
      %s129 = sphi 0, %s129
      %s131 = sphi 0, %s129
      %s132 = sphi 0, %s131
      %s146 = sphi 0, %s132
      %s150 = sphi 0, %s150
      %s152 = sphi 0, %s150
      %s153 = sphi 0, %s152
      %s167 = sphi 0, %s153
      %s171 = sphi 0, %s171
      %s173 = sphi 0, %s171
      %s174 = sphi 0, %s173
      %s188 = sphi 0, %s174
      %s192 = sphi 0, %s192
      %s194 = sphi 0, %s192
      %s195 = sphi 0, %s194
      %s209 = sphi 0, %s195
      %s213 = sphi 0, %s213
      %s215 = sphi 0, %s213
      %s216 = sphi 0, %s215
      %s230 = sphi 0, %s216
      %s234 = sphi 0, %s234
      %s236 = sphi 0, %s234
      %s237 = sphi 0, %s236
      %s251 = sphi 0, %s237
      %s255 = sphi 0, %s255
      %s257 = sphi 0, %s255
      %s258 = sphi 0, %s257
      %s272 = sphi 0, %s258
      %s276 = sphi 0, %s276
      %s278 = sphi 0, %s276
      %s279 = sphi 0, %s278
      %s293 = sphi 0, %s279
      %s297 = sphi 0, %s297
      %s299 = sphi 0, %s297
      %s300 = sphi 0, %s299
      %s314 = sphi 0, %s300
      %s320 = sphi 0, %s322
      %s323 = sphi 0, %s320
      %s324 = sphi 0, %s323
      %s340 = sphi 0, %s324
    $region4: #{tpu_custom_call.1} parent=1 // loop_header_branch
      %30 = sbr.rel (%p28) target = $region8
    $region5: #{tpu_custom_call.1} parent=1 // loop_body
      %s32 = ssub.s32 %s27, 1
      %s33 = ssub.s32 %s27, 2
      %s34 = sadd.s32 %s27, 1
      %s35 = ssub.s32 %s27, %s34
      %p36 = scmp.eq.s32.totalorder %s35, 0
      %s38 = sadd.s32 %s37, 1
      %s39 = scalar_select %p36, %s37, %s38
      %p42 = pneg %p36
      %p43 = scmp.eq.s32.totalorder %s27, 3
      %p44 = por %p42, %p43
      %p45 = scmp.ne.s32.totalorder %s37, %s40
      %p46 = scmp.eq.s32.totalorder %s27, 0
      %p47 = por %p45, %p46
      %p48 = scmp.ne.s32.totalorder %s37, %s40
      %p49 = scmp.eq.s32.totalorder %s32, 3
      %p50 = por %p48, %p49
      %p51 = scmp.ne.s32.totalorder %s40, %s41
      %p52 = scmp.eq.s32.totalorder %s32, 0
      %p53 = por %p51, %p52
      %p54 = scmp.ne.s32.totalorder %s40, %s41
      %p55 = scmp.eq.s32.totalorder %s33, 3
      %p56 = por %p54, %p55
      %p58 = scmp.ne.s32.totalorder %s41, %s57
      %p59 = scmp.eq.s32.totalorder %s33, 0
      %p60 = por %p58, %p59
      %s61 = ssub.s32 %s27, %s34
      %p62 = scmp.eq.s32.totalorder %s61, 0
      %s64 = sadd.s32 %s63, 1
      %s65 = scalar_select %p62, %s63, %s64
      %p68 = pneg %p62
      %p69 = scmp.eq.s32.totalorder %s27, 3
      %p70 = por %p68, %p69
      %p71 = scmp.ne.s32.totalorder %s63, %s66
      %p72 = scmp.eq.s32.totalorder %s27, 0
      %p73 = por %p71, %p72
      %p74 = scmp.ne.s32.totalorder %s63, %s66
      %p75 = scmp.eq.s32.totalorder %s32, 3
      %p76 = por %p74, %p75
      %p77 = scmp.ne.s32.totalorder %s66, %s67
      %p78 = scmp.eq.s32.totalorder %s32, 0
      %p79 = por %p77, %p78
      %p80 = scmp.ne.s32.totalorder %s66, %s67
      %p81 = scmp.eq.s32.totalorder %s33, 3
      %p82 = por %p80, %p81
      %p84 = scmp.ne.s32.totalorder %s67, %s83
      %p85 = scmp.eq.s32.totalorder %s33, 0
      %p86 = por %p84, %p85
      %s88 = sadd.s32 %s87, 1
      %p91 = scmp.eq.s32.totalorder %s27, 3
      %p92 = scmp.ne.s32.totalorder %s87, %s89
      %p93 = scmp.eq.s32.totalorder %s27, 0
      %p94 = por %p92, %p93
      %p95 = scmp.ne.s32.totalorder %s87, %s89
      %p96 = scmp.eq.s32.totalorder %s32, 3
      %p97 = por %p95, %p96
      %p98 = scmp.ne.s32.totalorder %s89, %s90
      %p99 = scmp.eq.s32.totalorder %s32, 0
      %p100 = por %p98, %p99
      %p101 = scmp.ne.s32.totalorder %s89, %s90
      %p102 = scmp.eq.s32.totalorder %s33, 3
      %p103 = por %p101, %p102
      %p105 = scmp.ne.s32.totalorder %s90, %s104
      %p106 = scmp.eq.s32.totalorder %s33, 0
      %p107 = por %p105, %p106
      %s109 = sadd.s32 %s108, 1
      %p112 = scmp.eq.s32.totalorder %s27, 3
      %p113 = scmp.ne.s32.totalorder %s108, %s110
      %p114 = scmp.eq.s32.totalorder %s27, 0
      %p115 = por %p113, %p114
      %p116 = scmp.ne.s32.totalorder %s108, %s110
      %p117 = scmp.eq.s32.totalorder %s32, 3
      %p118 = por %p116, %p117
      %p119 = scmp.ne.s32.totalorder %s110, %s111
      %p120 = scmp.eq.s32.totalorder %s32, 0
      %p121 = por %p119, %p120
      %p122 = scmp.ne.s32.totalorder %s110, %s111
      %p123 = scmp.eq.s32.totalorder %s33, 3
      %p124 = por %p122, %p123
      %p126 = scmp.ne.s32.totalorder %s111, %s125
      %p127 = scmp.eq.s32.totalorder %s33, 0
      %p128 = por %p126, %p127
      %s130 = sadd.s32 %s129, 1
      %p133 = scmp.eq.s32.totalorder %s27, 3
      %p134 = scmp.ne.s32.totalorder %s129, %s131
      %p135 = scmp.eq.s32.totalorder %s27, 0
      %p136 = por %p134, %p135
      %p137 = scmp.ne.s32.totalorder %s129, %s131
      %p138 = scmp.eq.s32.totalorder %s32, 3
      %p139 = por %p137, %p138
      %p140 = scmp.ne.s32.totalorder %s131, %s132
      %p141 = scmp.eq.s32.totalorder %s32, 0
      %p142 = por %p140, %p141
      %p143 = scmp.ne.s32.totalorder %s131, %s132
      %p144 = scmp.eq.s32.totalorder %s33, 3
      %p145 = por %p143, %p144
      %p147 = scmp.ne.s32.totalorder %s132, %s146
      %p148 = scmp.eq.s32.totalorder %s33, 0
      %p149 = por %p147, %p148
      %s151 = sadd.s32 %s150, 1
      %p154 = scmp.eq.s32.totalorder %s27, 3
      %p155 = scmp.ne.s32.totalorder %s150, %s152
      %p156 = scmp.eq.s32.totalorder %s27, 0
      %p157 = por %p155, %p156
      %p158 = scmp.ne.s32.totalorder %s150, %s152
      %p159 = scmp.eq.s32.totalorder %s32, 3
      %p160 = por %p158, %p159
      %p161 = scmp.ne.s32.totalorder %s152, %s153
      %p162 = scmp.eq.s32.totalorder %s32, 0
      %p163 = por %p161, %p162
      %p164 = scmp.ne.s32.totalorder %s152, %s153
      %p165 = scmp.eq.s32.totalorder %s33, 3
      %p166 = por %p164, %p165
      %p168 = scmp.ne.s32.totalorder %s153, %s167
      %p169 = scmp.eq.s32.totalorder %s33, 0
      %p170 = por %p168, %p169
      %s172 = sadd.s32 %s171, 1
      %p175 = scmp.eq.s32.totalorder %s27, 3
      %p176 = scmp.ne.s32.totalorder %s171, %s173
      %p177 = scmp.eq.s32.totalorder %s27, 0
      %p178 = por %p176, %p177
      %p179 = scmp.ne.s32.totalorder %s171, %s173
      %p180 = scmp.eq.s32.totalorder %s32, 3
      %p181 = por %p179, %p180
      %p182 = scmp.ne.s32.totalorder %s173, %s174
      %p183 = scmp.eq.s32.totalorder %s32, 0
      %p184 = por %p182, %p183
      %p185 = scmp.ne.s32.totalorder %s173, %s174
      %p186 = scmp.eq.s32.totalorder %s33, 3
      %p187 = por %p185, %p186
      %p189 = scmp.ne.s32.totalorder %s174, %s188
      %p190 = scmp.eq.s32.totalorder %s33, 0
      %p191 = por %p189, %p190
      %s193 = sadd.s32 %s192, 1
      %p196 = scmp.eq.s32.totalorder %s27, 3
      %p197 = scmp.ne.s32.totalorder %s192, %s194
      %p198 = scmp.eq.s32.totalorder %s27, 0
      %p199 = por %p197, %p198
      %p200 = scmp.ne.s32.totalorder %s192, %s194
      %p201 = scmp.eq.s32.totalorder %s32, 3
      %p202 = por %p200, %p201
      %p203 = scmp.ne.s32.totalorder %s194, %s195
      %p204 = scmp.eq.s32.totalorder %s32, 0
      %p205 = por %p203, %p204
      %p206 = scmp.ne.s32.totalorder %s194, %s195
      %p207 = scmp.eq.s32.totalorder %s33, 3
      %p208 = por %p206, %p207
      %p210 = scmp.ne.s32.totalorder %s195, %s209
      %p211 = scmp.eq.s32.totalorder %s33, 0
      %p212 = por %p210, %p211
      %s214 = sadd.s32 %s213, 1
      %p217 = scmp.eq.s32.totalorder %s27, 3
      %p218 = scmp.ne.s32.totalorder %s213, %s215
      %p219 = scmp.eq.s32.totalorder %s27, 0
      %p220 = por %p218, %p219
      %p221 = scmp.ne.s32.totalorder %s213, %s215
      %p222 = scmp.eq.s32.totalorder %s32, 3
      %p223 = por %p221, %p222
      %p224 = scmp.ne.s32.totalorder %s215, %s216
      %p225 = scmp.eq.s32.totalorder %s32, 0
      %p226 = por %p224, %p225
      %p227 = scmp.ne.s32.totalorder %s215, %s216
      %p228 = scmp.eq.s32.totalorder %s33, 3
      %p229 = por %p227, %p228
      %p231 = scmp.ne.s32.totalorder %s216, %s230
      %p232 = scmp.eq.s32.totalorder %s33, 0
      %p233 = por %p231, %p232
      %s235 = sadd.s32 %s234, 1
      %p238 = scmp.eq.s32.totalorder %s27, 3
      %p239 = scmp.ne.s32.totalorder %s234, %s236
      %p240 = scmp.eq.s32.totalorder %s27, 0
      %p241 = por %p239, %p240
      %p242 = scmp.ne.s32.totalorder %s234, %s236
      %p243 = scmp.eq.s32.totalorder %s32, 3
      %p244 = por %p242, %p243
      %p245 = scmp.ne.s32.totalorder %s236, %s237
      %p246 = scmp.eq.s32.totalorder %s32, 0
      %p247 = por %p245, %p246
      %p248 = scmp.ne.s32.totalorder %s236, %s237
      %p249 = scmp.eq.s32.totalorder %s33, 3
      %p250 = por %p248, %p249
      %p252 = scmp.ne.s32.totalorder %s237, %s251
      %p253 = scmp.eq.s32.totalorder %s33, 0
      %p254 = por %p252, %p253
      %s256 = sadd.s32 %s255, 1
      %p259 = scmp.eq.s32.totalorder %s27, 3
      %p260 = scmp.ne.s32.totalorder %s255, %s257
      %p261 = scmp.eq.s32.totalorder %s27, 0
      %p262 = por %p260, %p261
      %p263 = scmp.ne.s32.totalorder %s255, %s257
      %p264 = scmp.eq.s32.totalorder %s32, 3
      %p265 = por %p263, %p264
      %p266 = scmp.ne.s32.totalorder %s257, %s258
      %p267 = scmp.eq.s32.totalorder %s32, 0
      %p268 = por %p266, %p267
      %p269 = scmp.ne.s32.totalorder %s257, %s258
      %p270 = scmp.eq.s32.totalorder %s33, 3
      %p271 = por %p269, %p270
      %p273 = scmp.ne.s32.totalorder %s258, %s272
      %p274 = scmp.eq.s32.totalorder %s33, 0
      %p275 = por %p273, %p274
      %s277 = sadd.s32 %s276, 1
      %p280 = scmp.eq.s32.totalorder %s27, 3
      %p281 = scmp.ne.s32.totalorder %s276, %s278
      %p282 = scmp.eq.s32.totalorder %s27, 0
      %p283 = por %p281, %p282
      %p284 = scmp.ne.s32.totalorder %s276, %s278
      %p285 = scmp.eq.s32.totalorder %s32, 3
      %p286 = por %p284, %p285
      %p287 = scmp.ne.s32.totalorder %s278, %s279
      %p288 = scmp.eq.s32.totalorder %s32, 0
      %p289 = por %p287, %p288
      %p290 = scmp.ne.s32.totalorder %s278, %s279
      %p291 = scmp.eq.s32.totalorder %s33, 3
      %p292 = por %p290, %p291
      %p294 = scmp.ne.s32.totalorder %s279, %s293
      %p295 = scmp.eq.s32.totalorder %s33, 0
      %p296 = por %p294, %p295
      %s298 = sadd.s32 %s297, 1
      %p301 = scmp.eq.s32.totalorder %s27, 3
      %p302 = scmp.ne.s32.totalorder %s297, %s299
      %p303 = scmp.eq.s32.totalorder %s27, 0
      %p304 = por %p302, %p303
      %p305 = scmp.ne.s32.totalorder %s297, %s299
      %p306 = scmp.eq.s32.totalorder %s32, 3
      %p307 = por %p305, %p306
      %p308 = scmp.ne.s32.totalorder %s299, %s300
      %p309 = scmp.eq.s32.totalorder %s32, 0
      %p310 = por %p308, %p309
      %p311 = scmp.ne.s32.totalorder %s299, %s300
      %p312 = scmp.eq.s32.totalorder %s33, 3
      %p313 = por %p311, %p312
      %p315 = scmp.ne.s32.totalorder %s300, %s314
      %p316 = scmp.eq.s32.totalorder %s33, 0
      %p317 = por %p315, %p316
      %s318 = ssub.s32 %s27, %s34
      %p319 = scmp.eq.s32.totalorder %s318, 0
      %s321 = sadd.s32 %s320, 1
      %s322 = scalar_select %p319, %s320, %s321
      %p325 = pneg %p319
      %p326 = scmp.eq.s32.totalorder %s27, 3
      %p327 = por %p325, %p326
      %p328 = scmp.ne.s32.totalorder %s320, %s323
      %p329 = scmp.eq.s32.totalorder %s27, 0
      %p330 = por %p328, %p329
      %p331 = scmp.ne.s32.totalorder %s320, %s323
      %p332 = scmp.eq.s32.totalorder %s32, 3
      %p333 = por %p331, %p332
      %p334 = scmp.ne.s32.totalorder %s323, %s324
      %p335 = scmp.eq.s32.totalorder %s32, 0
      %p336 = por %p334, %p335
      %p337 = scmp.ne.s32.totalorder %s323, %s324
      %p338 = scmp.eq.s32.totalorder %s33, 3
      %p339 = por %p337, %p338
      %p341 = scmp.ne.s32.totalorder %s324, %s340
      %p342 = scmp.eq.s32.totalorder %s33, 0
      %p343 = por %p341, %p342
      %p344 = scmp.le.s32.totalorder 1, %s27
      %p345 = scmp.lt.s32.totalorder %s27, 5
      %p346 = pnand %p344, %p345
      %p347 = pneg %p346
      // Predicated region
      $region9: #{tpu_custom_call.1} parent=5 // pred_check
        _
      $region10: #{tpu_custom_call.1} parent=5 // pred_check_branch
        %349 = sbr.rel (%p346) target = $region12
      $region11: #{tpu_custom_call.1} parent=5 // pred_region
        %s350 = ssub.s32 %s27, 1
        // Predicated region
        $region13: #{tpu_custom_call.1} parent=11 // pred_check
          %p351 = pneg %p100
        $region14: #{tpu_custom_call.1} parent=11 // pred_check_branch
          %353 = sbr.rel (%p351) target = $region16
        $region15: #{tpu_custom_call.1} parent=11 // pred_region
          _
        $region16: #{tpu_custom_call.1} parent=11 // pred_fallthru
          _
        // Predicated region
        $region17: #{tpu_custom_call.1} parent=11 // pred_check
          %p354 = pneg %p121
        $region18: #{tpu_custom_call.1} parent=11 // pred_check_branch
          %356 = sbr.rel (%p354) target = $region20
        $region19: #{tpu_custom_call.1} parent=11 // pred_region
          _
        $region20: #{tpu_custom_call.1} parent=11 // pred_fallthru
          _
        // Predicated region
        $region21: #{tpu_custom_call.1} parent=11 // pred_check
          %p357 = pneg %p142
        $region22: #{tpu_custom_call.1} parent=11 // pred_check_branch
          %359 = sbr.rel (%p357) target = $region24
        $region23: #{tpu_custom_call.1} parent=11 // pred_region
          _
        $region24: #{tpu_custom_call.1} parent=11 // pred_fallthru
          _
        // Predicated region
        $region25: #{tpu_custom_call.1} parent=11 // pred_check
          %p360 = pneg %p163
        $region26: #{tpu_custom_call.1} parent=11 // pred_check_branch
          %362 = sbr.rel (%p360) target = $region28
        $region27: #{tpu_custom_call.1} parent=11 // pred_region
          _
        $region28: #{tpu_custom_call.1} parent=11 // pred_fallthru
          _
        // Predicated region
        $region29: #{tpu_custom_call.1} parent=11 // pred_check
          %p363 = pneg %p184
        $region30: #{tpu_custom_call.1} parent=11 // pred_check_branch
          %365 = sbr.rel (%p363) target = $region32
        $region31: #{tpu_custom_call.1} parent=11 // pred_region
          _
        $region32: #{tpu_custom_call.1} parent=11 // pred_fallthru
          _
        // Predicated region
        $region33: #{tpu_custom_call.1} parent=11 // pred_check
          %p366 = pneg %p205
        $region34: #{tpu_custom_call.1} parent=11 // pred_check_branch
          %368 = sbr.rel (%p366) target = $region36
        $region35: #{tpu_custom_call.1} parent=11 // pred_region
          _
        $region36: #{tpu_custom_call.1} parent=11 // pred_fallthru
          _
        // Predicated region
        $region37: #{tpu_custom_call.1} parent=11 // pred_check
          %p369 = pneg %p226
        $region38: #{tpu_custom_call.1} parent=11 // pred_check_branch
          %371 = sbr.rel (%p369) target = $region40
        $region39: #{tpu_custom_call.1} parent=11 // pred_region
          _
        $region40: #{tpu_custom_call.1} parent=11 // pred_fallthru
          _
        // Predicated region
        $region41: #{tpu_custom_call.1} parent=11 // pred_check
          %p372 = pneg %p247
        $region42: #{tpu_custom_call.1} parent=11 // pred_check_branch
          %374 = sbr.rel (%p372) target = $region44
        $region43: #{tpu_custom_call.1} parent=11 // pred_region
          _
        $region44: #{tpu_custom_call.1} parent=11 // pred_fallthru
          _
        // Predicated region
        $region45: #{tpu_custom_call.1} parent=11 // pred_check
          %p375 = pneg %p268
        $region46: #{tpu_custom_call.1} parent=11 // pred_check_branch
          %377 = sbr.rel (%p375) target = $region48
        $region47: #{tpu_custom_call.1} parent=11 // pred_region
          _
        $region48: #{tpu_custom_call.1} parent=11 // pred_fallthru
          _
        // Predicated region
        $region49: #{tpu_custom_call.1} parent=11 // pred_check
          %p378 = pneg %p289
        $region50: #{tpu_custom_call.1} parent=11 // pred_check_branch
          %380 = sbr.rel (%p378) target = $region52
        $region51: #{tpu_custom_call.1} parent=11 // pred_region
          _
        $region52: #{tpu_custom_call.1} parent=11 // pred_fallthru
          _
        // Predicated region
        $region53: #{tpu_custom_call.1} parent=11 // pred_check
          %p381 = pneg %p310
        $region54: #{tpu_custom_call.1} parent=11 // pred_check_branch
          %383 = sbr.rel (%p381) target = $region56
        $region55: #{tpu_custom_call.1} parent=11 // pred_region
          _
        $region56: #{tpu_custom_call.1} parent=11 // pred_fallthru
          _
      $region12: #{tpu_custom_call.1} parent=5 // pred_fallthru
        _
      %p384 = scmp.lt.s32.totalorder %s27, 4
      // Predicated region
      $region57: #{tpu_custom_call.1} parent=5 // pred_check
        %p385 = pneg %p384
      $region58: #{tpu_custom_call.1} parent=5 // pred_check_branch
        %387 = sbr.rel (%p385) target = $region60
      $region59: #{tpu_custom_call.1} parent=5 // pred_region
        // Predicated region
        $region61: #{tpu_custom_call.1} parent=59 // pred_check
          %p388 = pneg %p47
        $region62: #{tpu_custom_call.1} parent=59 // pred_check_branch
          %390 = sbr.rel (%p388) target = $region64
        $region63: #{tpu_custom_call.1} parent=59 // pred_region
          %s391 = sand.u32 %s37, 1
          %s392 = scalar_lea.sflag [#allocation5], %s391
          %s393 = sand.u32 %s37, 1
          %s394 = smul.addr %s393, 16
          %s395 = scalar_lea.vmem [#allocation4], %s394
          %s397 = ssub.s32 256, 256
          %398 = vsyncadd %s392, %s397
          %s399 = smul.addr %s27, 2
          %s400 = smul.addr %s399, 128
          %s401 = scalar_lea.hbm %s0, %s400
          %s402 = sshll.u32 %s395, 4
          %s403 = int_to_ptr.vmem [resolvable:$true] %s402
          %408 = dma.hbm_to_vmem [thread:$0]  %s401, 256, %s403, %s392, 128, 128, 8
        $region64: #{tpu_custom_call.1} parent=59 // pred_fallthru
          _
        // Predicated region
        $region65: #{tpu_custom_call.1} parent=59 // pred_check
          %p409 = pneg %p73
        $region66: #{tpu_custom_call.1} parent=59 // pred_check_branch
          %411 = sbr.rel (%p409) target = $region68
        $region67: #{tpu_custom_call.1} parent=59 // pred_region
          %p412 = scmp.lt.s32.totalorder %s27, 3
          %s413 = scalar_select %p412, %s27, 3
          %s414 = smul.addr %s413, 2
          %s415 = smul.addr %s414, 8
          %s416 = scalar_lea.vmem %s1, %s415
        $region68: #{tpu_custom_call.1} parent=59 // pred_fallthru
          _
      $region60: #{tpu_custom_call.1} parent=5 // pred_fallthru
        _
      %p417 = scmp.le.s32.totalorder 1, %s27
      %p418 = scmp.lt.s32.totalorder %s27, 5
      %p419 = pnand %p417, %p418
      %p420 = pneg %p419
      // Predicated region
      $region69: #{tpu_custom_call.1} parent=5 // pred_check
        _
      $region70: #{tpu_custom_call.1} parent=5 // pred_check_branch
        %422 = sbr.rel (%p419) target = $region72
      $region71: #{tpu_custom_call.1} parent=5 // pred_region
        %s423 = ssub.s32 %s27, 1
        %s424 = sand.u32 %s40, 1
        %s425 = scalar_lea.sflag [#allocation5], %s424
        %s426 = sand.u32 %s40, 1
        %s427 = smul.addr %s426, 16
        %s428 = scalar_lea.vmem [#allocation4], %s427
        // Predicated region
        $region73: #{tpu_custom_call.1} parent=71 // pred_check
          %p429 = pneg %p53
        $region74: #{tpu_custom_call.1} parent=71 // pred_check_branch
          %431 = sbr.rel (%p429) target = $region76
        $region75: #{tpu_custom_call.1} parent=71 // pred_region
          %432 = dma.done %s425, 256
        $region76: #{tpu_custom_call.1} parent=71 // pred_fallthru
          _
        %s433 = sand.u32 %s40, 1
        %s434 = scalar_lea.sflag [#allocation5], %s433
        %s435 = sand.u32 %s40, 1
        %s436 = smul.addr %s435, 16
        %s437 = scalar_lea.vmem [#allocation4], %s436
        %p438 = pneg %p53
        %p439 = pneg %p50
        %p440 = scmp.lt.s32.totalorder %s32, 3
        %s441 = scalar_select %p440, %s32, 3
        %s442 = smul.addr %s441, 2
        %s443 = smul.addr %s442, 8
        %s444 = scalar_lea.vmem %s1, %s443
        %p445 = pneg %p79
        %p446 = pneg %p76
        %p447 = pneg %p100
        %p448 = pneg %p97
        %p449 = pneg %p121
        %p450 = pneg %p118
        %p451 = pneg %p142
        %p452 = pneg %p139
        %p453 = pneg %p163
        %p454 = pneg %p160
        %p455 = pneg %p184
        %p456 = pneg %p181
        %p457 = pneg %p205
        %p458 = pneg %p202
        %p459 = pneg %p226
        %p460 = pneg %p223
        %p461 = pneg %p247
        %p462 = pneg %p244
        %p463 = pneg %p268
        %p464 = pneg %p265
        %p465 = pneg %p289
        %p466 = pneg %p286
        %p467 = pneg %p310
        %p468 = pneg %p307
        %p469 = pneg %p336
        %p470 = pneg %p333
        %s471 = sand.u32 %s323, 1
        %s472 = scalar_lea.sflag [#allocation6], %s471
        %s473 = sand.u32 %s323, 1
        %s474 = smul.addr %s473, 16
        %s475 = scalar_lea.vmem [#allocation7], %s474
        %p476 = scmp.lt.s32.totalorder %s32, 3
        %s477 = scalar_select %p476, %s32, 3
        %s478 = smul.addr %s477, 2
        %s479 = smul.addr %s478, 8
        %s480 = scalar_lea.vmem %s1, %s479
        %s481 = sld [smem:[#allocation2]]
        %s482 = sld [smem:[#allocation3]]
        %v483 = vld [vmem:[%s2] sm:$0xff]
        %v484 = vld [vmem:[%s2 + $0x8] sm:$0xff]
        %v485 = vld [vmem:[%s2 + $0x10] sm:$0xff]
        %v486 = vld [vmem:[%s2 + $0x18] sm:$0xff]
        %v487 = vld [vmem:[%s3] sm:$0xff]
        %v488 = vld [vmem:[%s3 + $0x8] sm:$0xff]
        %v489 = vld [vmem:[%s3 + $0x10] sm:$0xff]
        %v490 = vld [vmem:[%s3 + $0x18] sm:$0xff]
        %v491 = vld [vmem:[%s5] sm:$0xff]
        %v492 = vld [vmem:[%s5 + $0x8] sm:$0xff]
        %v493 = vld [vmem:[%s5 + $0x10] sm:$0xff]
        %v494 = vld [vmem:[%s5 + $0x18] sm:$0xff]
        %v495 = vld [vmem:[%s6] sm:$0xff]
        %v496 = vld [vmem:[%s6 + $0x8] sm:$0xff]
        %v497 = vld [vmem:[%s6 + $0x10] sm:$0xff]
        %v498 = vld [vmem:[%s6 + $0x18] sm:$0xff]
        %v499 = vld [vmem:[%s7] sm:$0xff]
        %v500 = vld [vmem:[%s7 + $0x8] sm:$0xff]
        %v501 = vld [vmem:[%s7 + $0x10] sm:$0xff]
        %v502 = vld [vmem:[%s7 + $0x18] sm:$0xff]
        %v503 = vld [vmem:[%s8] sm:$0xff]
        %v504 = vld [vmem:[%s8 + $0x8] sm:$0xff]
        %v505 = vld [vmem:[%s8 + $0x10] sm:$0xff]
        %v506 = vld [vmem:[%s8 + $0x18] sm:$0xff]
        %v507 = vld [vmem:[%s10] sm:$0xff]
        %v508 = vld [vmem:[%s10 + $0x8] sm:$0xff]
        %v509 = vld [vmem:[%s11] sm:$0xff]
        %v510 = vld [vmem:[%s11 + $0x8] sm:$0xff]
        %v511 = vld [vmem:[%s12] sm:$0xff]
        %v512 = vld [vmem:[%s12 + $0x8] sm:$0xff]
        %v513 = vlaneseq
        %v514 = vand.u32 %v513, 127
        %vm515 = vcmp.lt.s32.totalorder %v514, 100
        %v516 = vsel %vm515, 1, 0
        %v517 = vcvt.s32.f32 %v516
        %v518 = vld [vmem:[%s428] sm:$0xff]
        %v519 = vld [vmem:[%s428 + $0x8] sm:$0xff]
        %v520 = vld [vmem:[%s480] sm:$0xff]
        %v521 = vld [vmem:[%s480 + $0x8] sm:$0xff]
        %v522 = vmax.f32 %v520, 0.0
        %v523 = vmax.f32 %v521, 0.0
        %525 = vset.pattern.permute.xlu0 0
        %526 = vperm.xlu0 %525, %v522
        %v527 = vpop.permute.xlu0 %526
        %530 = vset.pattern.permute.xlu0 0
        %531 = vperm.xlu0 %530, %v523
        %v532 = vpop.permute.xlu0 %531
        %v534 = vmul.f32 %v518, %v527
        %v535 = vmul.f32 %v519, %v532
        %537 = vset.pattern.permute.xlu0 0
        %538 = vperm.xlu0 %537, %v487
        %v539 = vpop.permute.xlu0 %538
        %542 = vset.pattern.permute.xlu0 0
        %543 = vperm.xlu0 %542, %v488
        %v544 = vpop.permute.xlu0 %543
        %547 = vset.pattern.permute.xlu0 0
        %548 = vperm.xlu0 %547, %v489
        %v549 = vpop.permute.xlu0 %548
        %552 = vset.pattern.permute.xlu0 0
        %553 = vperm.xlu0 %552, %v490
        %v554 = vpop.permute.xlu0 %553
        %vm556 = vcmask 130048
        %v558 = vsel %vm556, %v483, 0
        %v561 = vsel %vm556, %v484, 0
        %v564 = vsel %vm556, %v485, 0
        %v567 = vsel %vm556, %v486, 0
        %569 = vmatprep.subr.mxu0 0.0
        %570 = vmatpush1.msra.mxu0 %v534
        %571 = vmatprep.subr.mxu0 0.0
        %572 = vmatpush1.msra.mxu0 %v535
        %573 = vmatprep.subr.mxu0 0.0
        %574 = vmatpush1.msra.mxu0 0.0
        %575 = vmatprep.subr.mxu0 0.0
        %576 = vmatpush1.msra.mxu0 0.0
        %577 = vmatprep.subr.mxu0 0.0
        %578 = vmatpush1.msra.mxu0 0.0
        %579 = vmatprep.subr.mxu0 0.0
        %580 = vmatpush1.msra.mxu0 0.0
        %581 = vmatprep.subr.mxu0 0.0
        %582 = vmatpush1.msra.mxu0 0.0
        %583 = vmatprep.subr.mxu0 0.0
        %584 = vmatpush1.msra.mxu0 0.0
        %585 = vmatprep.subr.mxu0 0.0
        %586 = vmatpush1.msra.mxu0 0.0
        %587 = vmatprep.subr.mxu0 0.0
        %588 = vmatpush1.msra.mxu0 0.0
        %589 = vmatprep.subr.mxu0 0.0
        %590 = vmatpush1.msra.mxu0 0.0
        %591 = vmatprep.subr.mxu0 0.0
        %592 = vmatpush1.msra.mxu0 0.0
        %593 = vmatprep.subr.mxu0 0.0
        %594 = vmatpush1.msra.mxu0 0.0
        %595 = vmatprep.subr.mxu0 0.0
        %596 = vmatpush1.msra.mxu0 0.0
        %597 = vmatprep.subr.mxu0 0.0
        %598 = vmatpush1.msra.mxu0 0.0
        %599 = vmatprep.subr.mxu0 0.0
        %600 = vmatpush1.msra.mxu0 0.0
        %601 = vmatprep.subr.mxu0 0.0
        %602 = vmatpush1.msra.mxu0 0.0
        %603 = vmatprep.subr.mxu0 0.0
        %604 = vmatpush1.msra.mxu0 0.0
        %605 = vmatprep.subr.mxu0 0.0
        %606 = vmatpush1.msra.mxu0 0.0
        %607 = vmatprep.subr.mxu0 0.0
        %608 = vmatpush1.msra.mxu0 0.0
        %609 = vmatprep.subr.mxu0 0.0
        %610 = vmatpush1.msra.mxu0 0.0
        %611 = vmatprep.subr.mxu0 0.0
        %612 = vmatpush1.msra.mxu0 0.0
        %613 = vmatprep.subr.mxu0 0.0
        %614 = vmatpush1.msra.mxu0 0.0
        %615 = vmatprep.subr.mxu0 0.0
        %616 = vmatpush1.msra.mxu0 0.0
        %617 = vmatprep.subr.mxu0 0.0
        %618 = vmatpush1.msra.mxu0 0.0
        %619 = vmatprep.subr.mxu0 0.0
        %620 = vmatpush1.msra.mxu0 0.0
        %621 = vmatprep.subr.mxu0 0.0
        %622 = vmatpush1.msra.mxu0 0.0
        %623 = vmatprep.subr.mxu0 0.0
        %624 = vmatpush1.msra.mxu0 0.0
        %625 = vmatprep.subr.mxu0 0.0
        %626 = vmatpush1.msra.mxu0 0.0
        %627 = vmatprep.subr.mxu0 0.0
        %628 = vmatpush1.msra.mxu0 0.0
        %629 = vmatprep.subr.mxu0 0.0
        %630 = vmatpush1.msra.mxu0 0.0
        %631 = vmatprep.subr.mxu0 0.0
        %632 = vmatpush1.msra.mxu0 0.0
        %633 = vmatprep.mubr.f32.mxu0 0.0
        %634 = vmatmul.mubr.f32.gmra.mrb[0].mxu0 %v558
        %v635 = vpop.f32.mrb[0].mxu0
        %v636 = vadd.f32 %v539, %v635
        %v637 = vpop.f32.mrb[0].mxu0
        %638 = vmatprep.mubr.f32.mxu0 0.0
        %639 = vmatmul.mubr.f32.gmra.mrb[0].mxu0 %v561
        %v640 = vpop.f32.mrb[0].mxu0
        %v641 = vadd.f32 %v544, %v640
        %v642 = vpop.f32.mrb[0].mxu0
        %643 = vmatprep.mubr.f32.mxu0 0.0
        %644 = vmatmul.mubr.f32.gmra.mrb[0].mxu0 %v564
        %v645 = vpop.f32.mrb[0].mxu0
        %v646 = vadd.f32 %v549, %v645
        %v647 = vpop.f32.mrb[0].mxu0
        %648 = vmatprep.mubr.f32.mxu0 0.0
        %649 = vmatmul.mubr.f32.gmra.mrb[0].mxu0 %v567
        %v650 = vpop.f32.mrb[0].mxu0
        %v651 = vadd.f32 %v554, %v650
        %v652 = vpop.f32.mrb[0].mxu0
        %653 = vdwg.mxu0
        %vm654 = vcmp.gt.f32.partialorder %v636, 0.0
        %vm655 = vcmp.gt.f32.partialorder %v641, 0.0
        %vm656 = vcmp.gt.f32.partialorder %v646, 0.0
        %vm657 = vcmp.gt.f32.partialorder %v651, 0.0
        %v658 = vstv %s481
        %v659 = vmul.f32 %v658, %v636
        %v660 = vmul.f32 %v658, %v641
        %v661 = vmul.f32 %v658, %v646
        %v662 = vmul.f32 %v658, %v651
        %v663 = vsel %vm654, %v636, %v659
        %v664 = vsel %vm655, %v641, %v660
        %v665 = vsel %vm656, %v646, %v661
        %v666 = vsel %vm657, %v651, %v662
        %vm667 = vcmp.gt.f32.partialorder %v487, 0.0
        %vm668 = vcmp.gt.f32.partialorder %v488, 0.0
        %vm669 = vcmp.gt.f32.partialorder %v489, 0.0
        %vm670 = vcmp.gt.f32.partialorder %v490, 0.0
        %v671 = vmul.f32 %v658, %v487
        %v672 = vmul.f32 %v658, %v488
        %v673 = vmul.f32 %v658, %v489
        %v674 = vmul.f32 %v658, %v490
        %v675 = vsel %vm667, %v487, %v671
        %v676 = vsel %vm668, %v488, %v672
        %v677 = vsel %vm669, %v489, %v673
        %v678 = vsel %vm670, %v490, %v674
        %679 = vadd.xlane.f32.xlu0 %v663
        %v680 = vpop.xlane.xlu0 %679
        %681 = vadd.xlane.f32.xlu0 %v664
        %v682 = vpop.xlane.xlu0 %681
        %683 = vadd.xlane.f32.xlu0 %v665
        %v684 = vpop.xlane.xlu0 %683
        %685 = vadd.xlane.f32.xlu0 %v666
        %v686 = vpop.xlane.xlu0 %685
        %v687 = vmul.f32 %v663, %v663
        %v688 = vmul.f32 %v664, %v664
        %v689 = vmul.f32 %v665, %v665
        %v690 = vmul.f32 %v666, %v666
        %691 = vadd.xlane.f32.xlu0 %v687
        %v692 = vpop.xlane.xlu0 %691
        %693 = vadd.xlane.f32.xlu0 %v688
        %v694 = vpop.xlane.xlu0 %693
        %695 = vadd.xlane.f32.xlu0 %v689
        %v696 = vpop.xlane.xlu0 %695
        %697 = vadd.xlane.f32.xlu0 %v690
        %v698 = vpop.xlane.xlu0 %697
        %vm699 = vcmask 7168
        %v700 = vsel %vm699, %v680, 0.0
        %v701 = vsel %vm699, %v682, 0.0
        %v702 = vadd.f32 %v700, %v701
        %v703 = vsel %vm699, %v684, 0.0
        %v704 = vadd.f32 %v702, %v703
        %v705 = vsel %vm699, %v686, 0.0
        %v706 = vadd.f32 %v704, %v705
        %707 = vadd.xlane.f32.xlu0 %v706
        %v708 = vpop.xlane.xlu0 %707
        %v709 = vrot.slane %v708, 4
        %v710 = vadd.f32 %v708, %v709
        %v711 = vrot.slane %v710, 2
        %v712 = vadd.f32 %v710, %v711
        %v713 = vrot.slane %v712, 1
        %v714 = vadd.f32 %v712, %v713
        %s715 = vtos %v714
        %v716 = vsel %vm699, %v675, 0.0
        %v717 = vsel %vm699, %v676, 0.0
        %v718 = vadd.f32 %v716, %v717
        %v719 = vsel %vm699, %v677, 0.0
        %v720 = vadd.f32 %v718, %v719
        %v721 = vsel %vm699, %v678, 0.0
        %v722 = vadd.f32 %v720, %v721
        %723 = vadd.xlane.f32.xlu0 %v722
        %v724 = vpop.xlane.xlu0 %723
        %v725 = vrot.slane %v724, 4
        %v726 = vadd.f32 %v724, %v725
        %v727 = vrot.slane %v726, 2
        %v728 = vadd.f32 %v726, %v727
        %v729 = vrot.slane %v728, 1
        %v730 = vadd.f32 %v728, %v729
        %s731 = vtos %v730
        %s732 = smul.f32 %s731, 28.0
        %s733 = ssub.f32 %s715, %s732
        %v734 = vsel %vm699, %v692, 0.0
        %v735 = vsel %vm699, %v694, 0.0
        %v736 = vadd.f32 %v734, %v735
        %v737 = vsel %vm699, %v696, 0.0
        %v738 = vadd.f32 %v736, %v737
        %v739 = vsel %vm699, %v698, 0.0
        %v740 = vadd.f32 %v738, %v739
        %741 = vadd.xlane.f32.xlu0 %v740
        %v742 = vpop.xlane.xlu0 %741
        %v743 = vrot.slane %v742, 4
        %v744 = vadd.f32 %v742, %v743
        %v745 = vrot.slane %v744, 2
        %v746 = vadd.f32 %v744, %v745
        %v747 = vrot.slane %v746, 1
        %v748 = vadd.f32 %v746, %v747
        %s749 = vtos %v748
        %v750 = vmul.f32 %v675, %v675
        %v751 = vmul.f32 %v676, %v676
        %v752 = vmul.f32 %v677, %v677
        %v753 = vmul.f32 %v678, %v678
        %v754 = vsel %vm699, %v750, 0.0
        %v755 = vsel %vm699, %v751, 0.0
        %v756 = vadd.f32 %v754, %v755
        %v757 = vsel %vm699, %v752, 0.0
        %v758 = vadd.f32 %v756, %v757
        %v759 = vsel %vm699, %v753, 0.0
        %v760 = vadd.f32 %v758, %v759
        %761 = vadd.xlane.f32.xlu0 %v760
        %v762 = vpop.xlane.xlu0 %761
        %v763 = vrot.slane %v762, 4
        %v764 = vadd.f32 %v762, %v763
        %v765 = vrot.slane %v764, 2
        %v766 = vadd.f32 %v764, %v765
        %v767 = vrot.slane %v766, 1
        %v768 = vadd.f32 %v766, %v767
        %s769 = vtos %v768
        %s770 = smul.f32 %s769, 28.0
        %s771 = ssub.f32 %s749, %s770
        %s772 = smul.f32 %s733, 0.0003125
        %s773 = smul.f32 %s771, 0.0003125
        %s774 = smul.f32 %s772, %s772
        %s775 = ssub.f32 %s773, %s774
        %s776 = smax.f32 %s775, 0.0
        %s777 = sadd.f32 %s776, 1e-05
        %v778 = vstv %s777
        %v779 = vrsqrt.pop %v778
        %s780 = vtos %v779
        %v781 = vstv %s780
        %v782 = vmul.f32 %v491, %v781
        %v783 = vmul.f32 %v492, %v781
        %v784 = vmul.f32 %v493, %v781
        %v785 = vmul.f32 %v494, %v781
        %v786 = vstv %s772
        %v787 = vmul.f32 %v786, %v782
        %v788 = vmul.f32 %v786, %v783
        %v789 = vmul.f32 %v786, %v784
        %v790 = vmul.f32 %v786, %v785
        %v791 = vsub.f32 %v495, %v787
        %v792 = vsub.f32 %v496, %v788
        %v793 = vsub.f32 %v497, %v789
        %v794 = vsub.f32 %v498, %v790
        %796 = vset.pattern.permute.xlu0 0
        %797 = vperm.xlu0 %796, %v782
        %v798 = vpop.permute.xlu0 %797
        %801 = vset.pattern.permute.xlu0 0
        %802 = vperm.xlu0 %801, %v783
        %v803 = vpop.permute.xlu0 %802
        %806 = vset.pattern.permute.xlu0 0
        %807 = vperm.xlu0 %806, %v784
        %v808 = vpop.permute.xlu0 %807
        %811 = vset.pattern.permute.xlu0 0
        %812 = vperm.xlu0 %811, %v785
        %v813 = vpop.permute.xlu0 %812
        %v815 = vmul.f32 %v798, %v663
        %v816 = vmul.f32 %v803, %v664
        %v817 = vmul.f32 %v808, %v665
        %v818 = vmul.f32 %v813, %v666
        %820 = vset.pattern.permute.xlu0 0
        %821 = vperm.xlu0 %820, %v791
        %v822 = vpop.permute.xlu0 %821
        %825 = vset.pattern.permute.xlu0 0
        %826 = vperm.xlu0 %825, %v792
        %v827 = vpop.permute.xlu0 %826
        %830 = vset.pattern.permute.xlu0 0
        %831 = vperm.xlu0 %830, %v793
        %v832 = vpop.permute.xlu0 %831
        %835 = vset.pattern.permute.xlu0 0
        %836 = vperm.xlu0 %835, %v794
        %v837 = vpop.permute.xlu0 %836
        %v839 = vadd.f32 %v815, %v822
        %v840 = vadd.f32 %v816, %v827
        %v841 = vadd.f32 %v817, %v832
        %v842 = vadd.f32 %v818, %v837
        %v843 = vmul.f32 %v839, %v517
        %v844 = vmul.f32 %v840, %v517
        %v845 = vmul.f32 %v841, %v517
        %v846 = vmul.f32 %v842, %v517
        %847 = vrot.lane.b32.xlu0 %v843, 1
        %v848 = vpop.permute.xlu0 %847
        %849 = vrot.lane.b32.xlu0 %v844, 1
        %v850 = vpop.permute.xlu0 %849
        %851 = vrot.lane.b32.xlu0 %v845, 1
        %v852 = vpop.permute.xlu0 %851
        %853 = vrot.lane.b32.xlu0 %v846, 1
        %v854 = vpop.permute.xlu0 %853
        %856 = vset.pattern.permute.xlu0 0
        %857 = vperm.xlu0 %856, %v499
        %v858 = vpop.permute.xlu0 %857
        %861 = vset.pattern.permute.xlu0 0
        %862 = vperm.xlu0 %861, %v500
        %v863 = vpop.permute.xlu0 %862
        %866 = vset.pattern.permute.xlu0 0
        %867 = vperm.xlu0 %866, %v501
        %v868 = vpop.permute.xlu0 %867
        %871 = vset.pattern.permute.xlu0 0
        %872 = vperm.xlu0 %871, %v502
        %v873 = vpop.permute.xlu0 %872
        %v875 = vmul.f32 %v858, %v848
        %v876 = vmul.f32 %v863, %v850
        %v877 = vmul.f32 %v868, %v852
        %v878 = vmul.f32 %v873, %v854
        %880 = vset.pattern.permute.xlu0 0
        %881 = vperm.xlu0 %880, %v503
        %v882 = vpop.permute.xlu0 %881
        %885 = vset.pattern.permute.xlu0 0
        %886 = vperm.xlu0 %885, %v504
        %v887 = vpop.permute.xlu0 %886
        %890 = vset.pattern.permute.xlu0 0
        %891 = vperm.xlu0 %890, %v505
        %v892 = vpop.permute.xlu0 %891
        %895 = vset.pattern.permute.xlu0 0
        %896 = vperm.xlu0 %895, %v506
        %v897 = vpop.permute.xlu0 %896
        %v899 = vadd.f32 %v882, %v875
        %v900 = vadd.f32 %v887, %v876
        %v901 = vadd.f32 %v892, %v877
        %v902 = vadd.f32 %v897, %v878
        %903 = vset.pattern.permute.xlu0 1
        %904 = vperm.xlu0 %903, %v499
        %v905 = vpop.permute.xlu0 %904
        %907 = vset.pattern.permute.xlu0 1
        %908 = vperm.xlu0 %907, %v500
        %v909 = vpop.permute.xlu0 %908
        %911 = vset.pattern.permute.xlu0 1
        %912 = vperm.xlu0 %911, %v501
        %v913 = vpop.permute.xlu0 %912
        %915 = vset.pattern.permute.xlu0 1
        %916 = vperm.xlu0 %915, %v502
        %v917 = vpop.permute.xlu0 %916
        %v919 = vmul.f32 %v905, %v843
        %v920 = vmul.f32 %v909, %v844
        %v921 = vmul.f32 %v913, %v845
        %v922 = vmul.f32 %v917, %v846
        %v923 = vadd.f32 %v899, %v919
        %v924 = vadd.f32 %v900, %v920
        %v925 = vadd.f32 %v901, %v921
        %v926 = vadd.f32 %v902, %v922
        %927 = vrot.lane.b32.xlu0 %v843, 127
        %v928 = vpop.permute.xlu0 %927
        %929 = vrot.lane.b32.xlu0 %v844, 127
        %v930 = vpop.permute.xlu0 %929
        %931 = vrot.lane.b32.xlu0 %v845, 127
        %v932 = vpop.permute.xlu0 %931
        %933 = vrot.lane.b32.xlu0 %v846, 127
        %v934 = vpop.permute.xlu0 %933
        %935 = vset.pattern.permute.xlu0 2
        %936 = vperm.xlu0 %935, %v499
        %v937 = vpop.permute.xlu0 %936
        %939 = vset.pattern.permute.xlu0 2
        %940 = vperm.xlu0 %939, %v500
        %v941 = vpop.permute.xlu0 %940
        %943 = vset.pattern.permute.xlu0 2
        %944 = vperm.xlu0 %943, %v501
        %v945 = vpop.permute.xlu0 %944
        %947 = vset.pattern.permute.xlu0 2
        %948 = vperm.xlu0 %947, %v502
        %v949 = vpop.permute.xlu0 %948
        %v951 = vmul.f32 %v937, %v928
        %v952 = vmul.f32 %v941, %v930
        %v953 = vmul.f32 %v945, %v932
        %v954 = vmul.f32 %v949, %v934
        %v955 = vadd.f32 %v923, %v951
        %v956 = vadd.f32 %v924, %v952
        %v957 = vadd.f32 %v925, %v953
        %v958 = vadd.f32 %v926, %v954
        %vm959 = vcmp.gt.f32.partialorder %v955, 0.0
        %vm960 = vcmp.gt.f32.partialorder %v956, 0.0
        %vm961 = vcmp.gt.f32.partialorder %v957, 0.0
        %vm962 = vcmp.gt.f32.partialorder %v958, 0.0
        %v963 = vstv %s482
        %v964 = vmul.f32 %v963, %v955
        %v965 = vmul.f32 %v963, %v956
        %v966 = vmul.f32 %v963, %v957
        %v967 = vmul.f32 %v963, %v958
        %v968 = vsel %vm959, %v955, %v964
        %v969 = vsel %vm960, %v956, %v965
        %v970 = vsel %vm961, %v957, %v966
        %v971 = vsel %vm962, %v958, %v967
        %v972 = vmul.f32 %v968, %v517
        %v973 = vmul.f32 %v969, %v517
        %v974 = vmul.f32 %v970, %v517
        %v975 = vmul.f32 %v971, %v517
        %976 = vadd.xlane.f32.xlu0 %v972
        %v977 = vpop.xlane.xlu0 %976
        %978 = vadd.xlane.f32.xlu0 %v973
        %v979 = vpop.xlane.xlu0 %978
        %980 = vadd.xlane.f32.xlu0 %v974
        %v981 = vpop.xlane.xlu0 %980
        %982 = vadd.xlane.f32.xlu0 %v975
        %v983 = vpop.xlane.xlu0 %982
        %v984 = vmul.f32 %v972, %v972
        %v985 = vmul.f32 %v973, %v973
        %v986 = vmul.f32 %v974, %v974
        %v987 = vmul.f32 %v975, %v975
        %988 = vadd.xlane.f32.xlu0 %v984
        %v989 = vpop.xlane.xlu0 %988
        %990 = vadd.xlane.f32.xlu0 %v985
        %v991 = vpop.xlane.xlu0 %990
        %992 = vadd.xlane.f32.xlu0 %v986
        %v993 = vpop.xlane.xlu0 %992
        %994 = vadd.xlane.f32.xlu0 %v987
        %v995 = vpop.xlane.xlu0 %994
        %v996 = vsel %vm699, %v977, 0.0
        %v997 = vsel %vm699, %v979, 0.0
        %v998 = vadd.f32 %v996, %v997
        %v999 = vsel %vm699, %v981, 0.0
        %v1000 = vadd.f32 %v998, %v999
        %v1001 = vsel %vm699, %v983, 0.0
        %v1002 = vadd.f32 %v1000, %v1001
        %1003 = vadd.xlane.f32.xlu0 %v1002
        %v1004 = vpop.xlane.xlu0 %1003
        %v1005 = vrot.slane %v1004, 4
        %v1006 = vadd.f32 %v1004, %v1005
        %v1007 = vrot.slane %v1006, 2
        %v1008 = vadd.f32 %v1006, %v1007
        %v1009 = vrot.slane %v1008, 1
        %v1010 = vadd.f32 %v1008, %v1009
        %s1011 = vtos %v1010
        %v1012 = vsel %vm699, %v989, 0.0
        %v1013 = vsel %vm699, %v991, 0.0
        %v1014 = vadd.f32 %v1012, %v1013
        %v1015 = vsel %vm699, %v993, 0.0
        %v1016 = vadd.f32 %v1014, %v1015
        %v1017 = vsel %vm699, %v995, 0.0
        %v1018 = vadd.f32 %v1016, %v1017
        %1019 = vadd.xlane.f32.xlu0 %v1018
        %v1020 = vpop.xlane.xlu0 %1019
        %v1021 = vrot.slane %v1020, 4
        %v1022 = vadd.f32 %v1020, %v1021
        %v1023 = vrot.slane %v1022, 2
        %v1024 = vadd.f32 %v1022, %v1023
        %v1025 = vrot.slane %v1024, 1
        %v1026 = vadd.f32 %v1024, %v1025
        %s1027 = vtos %v1026
        %s1028 = smul.f32 %s1011, 0.0003125
        %s1029 = smul.f32 %s1027, 0.0003125
        %s1030 = smul.f32 %s1028, %s1028
        %s1031 = ssub.f32 %s1029, %s1030
        %s1032 = smax.f32 %s1031, 0.0
        %s1033 = sadd.f32 %s1032, 1e-05
        %v1034 = vstv %s1033
        %v1035 = vrsqrt.pop %v1034
        %s1036 = vtos %v1035
        %vm1037 = vcmask 261120
        %v1039 = vsel %vm1037, %v507, 0
        %v1042 = vsel %vm1037, %v508, 0
        %1044 = vmatprep.subr.mxu0 0.0
        %1045 = vmatpush1.msra.mxu0 %v968
        %1046 = vmatprep.subr.mxu0 0.0
        %1047 = vmatpush1.msra.mxu0 %v969
        %1048 = vmatprep.subr.mxu0 0.0
        %1049 = vmatpush1.msra.mxu0 %v970
        %1050 = vmatprep.subr.mxu0 0.0
        %1051 = vmatpush1.msra.mxu0 %v971
        %1052 = vmatprep.subr.mxu0 0.0
        %1053 = vmatpush1.msra.mxu0 0.0
        %1054 = vmatprep.subr.mxu0 0.0
        %1055 = vmatpush1.msra.mxu0 0.0
        %1056 = vmatprep.subr.mxu0 0.0
        %1057 = vmatpush1.msra.mxu0 0.0
        %1058 = vmatprep.subr.mxu0 0.0
        %1059 = vmatpush1.msra.mxu0 0.0
        %1060 = vmatprep.subr.mxu0 0.0
        %1061 = vmatpush1.msra.mxu0 0.0
        %1062 = vmatprep.subr.mxu0 0.0
        %1063 = vmatpush1.msra.mxu0 0.0
        %1064 = vmatprep.subr.mxu0 0.0
        %1065 = vmatpush1.msra.mxu0 0.0
        %1066 = vmatprep.subr.mxu0 0.0
        %1067 = vmatpush1.msra.mxu0 0.0
        %1068 = vmatprep.subr.mxu0 0.0
        %1069 = vmatpush1.msra.mxu0 0.0
        %1070 = vmatprep.subr.mxu0 0.0
        %1071 = vmatpush1.msra.mxu0 0.0
        %1072 = vmatprep.subr.mxu0 0.0
        %1073 = vmatpush1.msra.mxu0 0.0
        %1074 = vmatprep.subr.mxu0 0.0
        %1075 = vmatpush1.msra.mxu0 0.0
        %1076 = vmatprep.subr.mxu0 0.0
        %1077 = vmatpush1.msra.mxu0 0.0
        %1078 = vmatprep.subr.mxu0 0.0
        %1079 = vmatpush1.msra.mxu0 0.0
        %1080 = vmatprep.subr.mxu0 0.0
        %1081 = vmatpush1.msra.mxu0 0.0
        %1082 = vmatprep.subr.mxu0 0.0
        %1083 = vmatpush1.msra.mxu0 0.0
        %1084 = vmatprep.subr.mxu0 0.0
        %1085 = vmatpush1.msra.mxu0 0.0
        %1086 = vmatprep.subr.mxu0 0.0
        %1087 = vmatpush1.msra.mxu0 0.0
        %1088 = vmatprep.subr.mxu0 0.0
        %1089 = vmatpush1.msra.mxu0 0.0
        %1090 = vmatprep.subr.mxu0 0.0
        %1091 = vmatpush1.msra.mxu0 0.0
        %1092 = vmatprep.subr.mxu0 0.0
        %1093 = vmatpush1.msra.mxu0 0.0
        %1094 = vmatprep.subr.mxu0 0.0
        %1095 = vmatpush1.msra.mxu0 0.0
        %1096 = vmatprep.subr.mxu0 0.0
        %1097 = vmatpush1.msra.mxu0 0.0
        %1098 = vmatprep.subr.mxu0 0.0
        %1099 = vmatpush1.msra.mxu0 0.0
        %1100 = vmatprep.subr.mxu0 0.0
        %1101 = vmatpush1.msra.mxu0 0.0
        %1102 = vmatprep.subr.mxu0 0.0
        %1103 = vmatpush1.msra.mxu0 0.0
        %1104 = vmatprep.subr.mxu0 0.0
        %1105 = vmatpush1.msra.mxu0 0.0
        %1106 = vmatprep.subr.mxu0 0.0
        %1107 = vmatpush1.msra.mxu0 0.0
        %1108 = vmatprep.mubr.f32.mxu0 0.0
        %1109 = vmatmul.mubr.f32.gmra.mrb[0].mxu0 %v1039
        %v1110 = vpop.f32.mrb[0].mxu0
        %v1111 = vadd.f32 0.0, %v1110
        %v1112 = vpop.f32.mrb[0].mxu0
        %1113 = vmatprep.mubr.f32.mxu0 0.0
        %1114 = vmatmul.mubr.f32.gmra.mrb[0].mxu0 %v1042
        %v1115 = vpop.f32.mrb[0].mxu0
        %v1116 = vadd.f32 0.0, %v1115
        %v1117 = vpop.f32.mrb[0].mxu0
        %1118 = vdwg.mxu0
        %v1119 = vstv %s1036
        %v1120 = vmul.f32 %v1111, %v1119
        %v1121 = vmul.f32 %v1116, %v1119
        %s1122 = smul.f32 %s1036, %s1028
        %v1123 = vstv %s1122
        %v1124 = vmul.f32 %v1123, %v509
        %v1125 = vmul.f32 %v1123, %v510
        %v1126 = vsub.f32 %v511, %v1124
        %v1127 = vsub.f32 %v512, %v1125
        %1129 = vset.pattern.permute.xlu0 0
        %1130 = vperm.xlu0 %1129, %v1126
        %v1131 = vpop.permute.xlu0 %1130
        %1134 = vset.pattern.permute.xlu0 0
        %1135 = vperm.xlu0 %1134, %v1127
        %v1136 = vpop.permute.xlu0 %1135
        %v1138 = vadd.f32 %v1120, %v1131
        %v1139 = vadd.f32 %v1121, %v1136
        %v1140 = vadd.f32 %v1138, %v518
        %v1141 = vadd.f32 %v1139, %v519
        %1142 = vst [vmem:[%s475] sm:$0xff] %v1140
        %1143 = vst [vmem:[%s475 + $0x8] sm:$0xff] %v1141
        %s1144 = sand.u32 %s323, 1
        %s1145 = scalar_lea.sflag [#allocation6], %s1144
        %s1146 = sand.u32 %s323, 1
        %s1147 = smul.addr %s1146, 16
        %s1148 = scalar_lea.vmem [#allocation7], %s1147
        // Predicated region
        $region77: #{tpu_custom_call.1} parent=71 // pred_check
          %p1149 = pneg %p333
        $region78: #{tpu_custom_call.1} parent=71 // pred_check_branch
          %1151 = sbr.rel (%p1149) target = $region80
        $region79: #{tpu_custom_call.1} parent=71 // pred_region
          %s1153 = ssub.s32 256, 256
          %1154 = vsyncadd %s1145, %s1153
          %s1155 = smul.addr %s32, 2
          %s1156 = smul.addr %s1155, 128
          %s1157 = scalar_lea.hbm %s13, %s1156
          %s1158 = sshll.u32 %s1148, 4
          %s1159 = int_to_ptr.vmem [resolvable:$true] %s1158
          %1164 = dma.vmem_to_hbm [thread:$0]  %s1159, 256, %s1157, %s1145, 128, 128, 8
        $region80: #{tpu_custom_call.1} parent=71 // pred_fallthru
          _
      $region72: #{tpu_custom_call.1} parent=5 // pred_fallthru
        _
      %p1165 = scmp.le.s32.totalorder 2, %s27
      // Predicated region
      $region81: #{tpu_custom_call.1} parent=5 // pred_check
        %p1166 = pneg %p1165
      $region82: #{tpu_custom_call.1} parent=5 // pred_check_branch
        %1168 = sbr.rel (%p1166) target = $region84
      $region83: #{tpu_custom_call.1} parent=5 // pred_region
        %s1169 = ssub.s32 %s27, 2
        // Predicated region
        $region85: #{tpu_custom_call.1} parent=83 // pred_check
          %p1170 = pneg %p339
        $region86: #{tpu_custom_call.1} parent=83 // pred_check_branch
          %1172 = sbr.rel (%p1170) target = $region88
        $region87: #{tpu_custom_call.1} parent=83 // pred_region
          %s1173 = sand.u32 %s324, 1
          %s1174 = scalar_lea.sflag [#allocation6], %s1173
          %s1175 = sand.u32 %s324, 1
          %s1176 = smul.addr %s1175, 16
          %s1177 = scalar_lea.vmem [#allocation7], %s1176
          %1178 = dma.done %s1174, 256
        $region88: #{tpu_custom_call.1} parent=83 // pred_fallthru
          _
      $region84: #{tpu_custom_call.1} parent=5 // pred_fallthru
        _
    $region6: #{tpu_custom_call.1} parent=1 // loop_footer
      %s31 = sadd.s32 1, %s27
    $region7: #{tpu_custom_call.1} parent=1 // loop_footer_branch
      %26 = sbr.rel target = $region3
    $region8: #{tpu_custom_call.1} parent=1 // loop_exit
      _
    %1179 = vsyncpa [#allocation5], 1
    %s1180 = scalar_lea.sflag [#allocation5], 1
    %1181 = vsyncpa %s1180, 1
    %1182 = vsyncpa [#allocation6], 1
    %s1183 = scalar_lea.sflag [#allocation6], 1
    %1184 = vsyncpa %s1183, 1

</llo_original>
